<compile_context>
chip_gen: v5e
topology: v5e:2x2
jax: 0.10.0
libtpu: 0.0.40
codegen_flags: <defaults>
</compile_context>

<pallas_src>
import functools

import numpy as np
import jax
import jax.numpy as jnp
from jax.experimental import pallas as pl
from jax.experimental.pallas import tpu as pltpu


# ----------------------------------------------------------------------------
# Fused 3x3 conv (stride 1, pad 1, no bias) + PixelUnshuffle(2) kernel
# ----------------------------------------------------------------------------
def _downsample_kernel(x_ref, w_ref, t_ref, o_ref, xpf_ref, col_ref, *, B, C, H, W):
    """Single-invocation kernel (grid=(1,)).

    x_ref  : (B, C, H, W)        raw input (padding fused in-kernel)
    w_ref  : (Cout, 9*C)         flattened conv weight, row order (di*3+dj)*C + c
    t_ref  : (H*Wp, 4*H2*W2)     0/1 unshuffle + guard-strip selection matrix
    o_ref  : (B, Cout, 4*H2*W2)  lane-dense output slab, columns = (phase, h2, w2)
    xpf_ref: (C, Lp)             flattened zero-padded image scratch
    col_ref: (9*C, H*Wp)         im2col scratch (single K = 9*C contraction)
    """
    Hp, Wp = H + 2, W + 2
    n_out = H * Wp

    # Zero the padded scratch once: only the interior is rewritten per batch, so
    # the borders and the 2 flat guard columns stay zero for every image.
    xpf_ref[...] = jnp.zeros_like(xpf_ref)

    w_flat = w_ref[...]   # (Cout, 9*C)
    t_mat = t_ref[...]    # (H*Wp, 4*H2*W2)

    for b in range(B):  # static unroll; the whole batch lives in VMEM
        # ---- fused zero-padding: scatter image rows into the flat padded buffer.
        for h in range(H):
            xpf_ref[:, pl.ds((h + 1) * Wp + 1, W)] = x_ref[b, :, h, :]

        # ---- im2col: each tap is a lane-offset slice of the flat padded image,
        #      copied once so all 9 taps fuse into one K = 9*C matmul.
        for di in range(3):
            for dj in range(3):
                t = di * 3 + dj
                off = di * Wp + dj
                col_ref[pl.ds(t * C, C), :] = xpf_ref[:, pl.ds(off, n_out)]

        # ---- single fat MXU contraction: (Cout, 9*C) @ (9*C, H*Wp)
        y = jnp.dot(w_flat, col_ref[...], preferred_element_type=jnp.float32)

        # ---- PixelUnshuffle(2) + guard-column strip as a selection matmul.
        #      Output columns are (phase, h2, w2) so the store is one lane-dense,
        #      unmasked write per image.
        y = jnp.dot(y, t_mat, preferred_element_type=jnp.float32)
        o_ref[b] = y.astype(o_ref.dtype)


def _unshuffle_selection_matrix(H, W):
    """0/1 matrix mapping flat conv columns (h*Wp + w') -> (phase, h2, w2) columns.

    phase = 2*i + j matches torch.nn.PixelUnshuffle(2) channel ordering.
    Built with numpy at trace time (compile-time constant)."""
    Hp, Wp = H + 2, W + 2
    H2, W2 = H // 2, W // 2
    n_in = H * Wp
    n_sel = 4 * H2 * W2
    T = np.zeros((n_in, n_sel), np.float32)
    m = np.arange(n_sel)
    phase, rem = divmod(m, H2 * W2)
    i, j = divmod(phase, 2)
    h2, w2 = divmod(rem, W2)
    n = (2 * h2 + i) * Wp + (2 * w2 + j)
    T[n, m] = 1.0
    return T


@functools.partial(jax.jit, static_argnames=("compute_dtype",))
def downsample_forward(x, w, compute_dtype=jnp.float32):
    """x: (B, C, H, W), w: (C//2, C, 3, 3) -> (B, 2*C, H//2, W//2)."""
    B, C, H, W = x.shape
    Cout = w.shape[0]
    assert H % 2 == 0 and W % 2 == 0, "PixelUnshuffle(2) needs even spatial dims"
    Hp, Wp = H + 2, W + 2
    H2, W2 = H // 2, W // 2
    n_out = H * Wp
    Lp = Hp * Wp + 2          # flat padded image + 2 guard columns
    n_sel = 4 * H2 * W2

    # (Cout, C, 3, 3) -> (Cout, 9*C) with column order (di*3+dj)*C + c  (tiny, one-time).
    w_flat = jnp.transpose(w, (0, 2, 3, 1)).reshape(Cout, 9 * C).astype(compute_dtype)
    x_c = x.astype(compute_dtype)
    t_mat = jnp.asarray(_unshuffle_selection_matrix(H, W), compute_dtype)

    kernel = functools.partial(_downsample_kernel, B=B, C=C, H=H, W=W)

    itemsize = jnp.dtype(compute_dtype).itemsize
    flops = 2 * B * (Cout * (9 * C) * n_out + Cout * n_out * n_sel)
    bytes_accessed = (x_c.size + w_flat.size + t_mat.size) * itemsize \
        + B * Cout * n_sel * jnp.dtype(x.dtype).itemsize

    out = pl.pallas_call(
        kernel,
        out_shape=jax.ShapeDtypeStruct((B, Cout, n_sel), x.dtype),
        grid=(1,),
        in_specs=[
            pl.BlockSpec((B, C, H, W), lambda i: (0, 0, 0, 0)),
            pl.BlockSpec((Cout, 9 * C), lambda i: (0, 0)),
            pl.BlockSpec((n_out, n_sel), lambda i: (0, 0)),
        ],
        out_specs=pl.BlockSpec((B, Cout, n_sel), lambda i: (0, 0, 0)),
        scratch_shapes=[
            pltpu.VMEM((C, Lp), compute_dtype),         # flat zero-padded image
            pltpu.VMEM((9 * C, n_out), compute_dtype),  # im2col slab
        ],
        compiler_params=pltpu.CompilerParams(dimension_semantics=("arbitrary",)),
        cost_estimate=pl.CostEstimate(flops=flops, transcendentals=0,
                                      bytes_accessed=bytes_accessed),
    )(x_c, w_flat, t_mat)

    # Columns are already (phase, h2, w2); channel merge c*4 + phase is a pure
    # leading-dim split/merge, so this reshape is the only wrapper op on the output.
    return out.reshape(B, 4 * Cout, H2, W2)


# ----------------------------------------------------------------------------
# Pure-JAX reference (XLA conv + independent unshuffle) for correctness check
# ----------------------------------------------------------------------------
def downsample_reference(x, w):
    y = jax.lax.conv_general_dilated(
        x, w, window_strides=(1, 1), padding=((1, 1), (1, 1)),
        dimension_numbers=("NCHW", "OIHW", "NCHW"))
    B, Cout, H, W = y.shape
    r = 2
    y = y.reshape(B, Cout, H // r, r, W // r, r)
    y = jnp.transpose(y, (0, 1, 3, 5, 2, 4))
    return y.reshape(B, Cout * r * r, H // r, W // r)


if __name__ == "__main__":
    B, n_feat, H, W = 2, 8, 16, 16

    key = jax.random.PRNGKey(0)
    kx, kw = jax.random.split(key)
    x = jax.random.normal(kx, (B, n_feat, H, W), jnp.float32)
    # nn.Conv2d(n_feat, n_feat // 2, 3, bias=False) weight: (n_feat//2, n_feat, 3, 3)
    w = jax.random.normal(kw, (n_feat // 2, n_feat, 3, 3), jnp.float32) * 0.1

    out = jax.block_until_ready(downsample_forward(x, w))
    ref = jax.block_until_ready(downsample_reference(x, w))

    assert out.shape == (B, 2 * n_feat, H // 2, W // 2), out.shape
    max_err = float(jnp.max(jnp.abs(out - ref)))
    assert jnp.allclose(out, ref, rtol=1e-4, atol=1e-4), f"max abs err {max_err}"
    print("KERNEL_OK")
</pallas_src>

<mosaic_0001>
module attributes {stable_mosaic.version = 11 : i64} {
  func.func @_downsample_kernel(%arg0: i32, %arg1: memref<2x8x16x16xf32, #tpu.memory_space<vmem>>, %arg2: memref<4x72xf32, #tpu.memory_space<vmem>>, %arg3: memref<288x256xf32, #tpu.memory_space<vmem>>, %arg4: memref<2x4x256xf32, #tpu.memory_space<vmem>>, %arg5: memref<8x326xf32, #tpu.memory_space<vmem>>, %arg6: memref<72x288xf32, #tpu.memory_space<vmem>>) attributes {dimension_semantics = [#tpu.dimension_semantics<arbitrary>], iteration_bounds = array<i64: 1>, scalar_prefetch = 0 : i64, scratch_operands = 2 : i64, tpu.core_type = #tpu.core_type<tc>, window_params = [{pipeline_mode = #tpu.pipeline_mode<synchronous>, transform_indices = @transform_0, window_bounds = array<i64: 2, 8, 16, 16>}, {pipeline_mode = #tpu.pipeline_mode<synchronous>, transform_indices = @transform_1, window_bounds = array<i64: 4, 72>}, {pipeline_mode = #tpu.pipeline_mode<synchronous>, transform_indices = @transform_2, window_bounds = array<i64: 288, 256>}, {pipeline_mode = #tpu.pipeline_mode<synchronous>, transform_indices = @transform_3, window_bounds = array<i64: 2, 4, 256>}]} {
    %cst = arith.constant 0.000000e+00 : f32
    %0 = vector.broadcast %cst : f32 to vector<8x326xf32>
    %c0 = arith.constant 0 : index
    %c0_0 = arith.constant 0 : index
    %1 = vector.load %arg5[%c0, %c0_0] : memref<8x326xf32, #tpu.memory_space<vmem>>, vector<8x326xf32>
    tpu.vector_store %arg5[%c0, %c0_0], %0 {strides = array<i32>} : memref<8x326xf32, #tpu.memory_space<vmem>>, vector<8x326xf32>,
    %c0_1 = arith.constant 0 : index
    %c0_2 = arith.constant 0 : index
    %2 = vector.load %arg2[%c0_1, %c0_2] : memref<4x72xf32, #tpu.memory_space<vmem>>, vector<4x72xf32>
    %c0_3 = arith.constant 0 : index
    %c0_4 = arith.constant 0 : index
    %3 = vector.load %arg3[%c0_3, %c0_4] : memref<288x256xf32, #tpu.memory_space<vmem>>, vector<288x256xf32>
    %c0_5 = arith.constant 0 : index
    %c0_6 = arith.constant 0 : index
    %c0_7 = arith.constant 0 : index
    %c0_8 = arith.constant 0 : index
    %4 = vector.load %arg1[%c0_5, %c0_6, %c0_7, %c0_8] : memref<2x8x16x16xf32, #tpu.memory_space<vmem>>, vector<1x8x1x16xf32>
    %5 = vector.shape_cast %4 : vector<1x8x1x16xf32> to vector<8x16xf32>
    %c0_9 = arith.constant 0 : index
    %c19 = arith.constant 19 : index
    %6 = vector.load %arg5[%c0_9, %c19] : memref<8x326xf32, #tpu.memory_space<vmem>>, vector<8x16xf32>
    tpu.vector_store %arg5[%c0_9, %c19], %5 {strides = array<i32>} : memref<8x326xf32, #tpu.memory_space<vmem>>, vector<8x16xf32>,
    %c0_10 = arith.constant 0 : index
    %c0_11 = arith.constant 0 : index
    %c1 = arith.constant 1 : index
    %c0_12 = arith.constant 0 : index
    %7 = vector.load %arg1[%c0_10, %c0_11, %c1, %c0_12] : memref<2x8x16x16xf32, #tpu.memory_space<vmem>>, vector<1x8x1x16xf32>
    %8 = vector.shape_cast %7 : vector<1x8x1x16xf32> to vector<8x16xf32>
    %c0_13 = arith.constant 0 : index
    %c37 = arith.constant 37 : index
    %9 = vector.load %arg5[%c0_13, %c37] : memref<8x326xf32, #tpu.memory_space<vmem>>, vector<8x16xf32>
    tpu.vector_store %arg5[%c0_13, %c37], %8 {strides = array<i32>} : memref<8x326xf32, #tpu.memory_space<vmem>>, vector<8x16xf32>,
    %c0_14 = arith.constant 0 : index
    %c0_15 = arith.constant 0 : index
    %c2 = arith.constant 2 : index
    %c0_16 = arith.constant 0 : index
    %10 = vector.load %arg1[%c0_14, %c0_15, %c2, %c0_16] : memref<2x8x16x16xf32, #tpu.memory_space<vmem>>, vector<1x8x1x16xf32>
    %11 = vector.shape_cast %10 : vector<1x8x1x16xf32> to vector<8x16xf32>
    %c0_17 = arith.constant 0 : index
    %c55 = arith.constant 55 : index
    %12 = vector.load %arg5[%c0_17, %c55] : memref<8x326xf32, #tpu.memory_space<vmem>>, vector<8x16xf32>
    tpu.vector_store %arg5[%c0_17, %c55], %11 {strides = array<i32>} : memref<8x326xf32, #tpu.memory_space<vmem>>, vector<8x16xf32>,
    %c0_18 = arith.constant 0 : index
    %c0_19 = arith.constant 0 : index
    %c3 = arith.constant 3 : index
    %c0_20 = arith.constant 0 : index
    %13 = vector.load %arg1[%c0_18, %c0_19, %c3, %c0_20] : memref<2x8x16x16xf32, #tpu.memory_space<vmem>>, vector<1x8x1x16xf32>
    %14 = vector.shape_cast %13 : vector<1x8x1x16xf32> to vector<8x16xf32>
    %c0_21 = arith.constant 0 : index
    %c73 = arith.constant 73 : index
    %15 = vector.load %arg5[%c0_21, %c73] : memref<8x326xf32, #tpu.memory_space<vmem>>, vector<8x16xf32>
    tpu.vector_store %arg5[%c0_21, %c73], %14 {strides = array<i32>} : memref<8x326xf32, #tpu.memory_space<vmem>>, vector<8x16xf32>,
    %c0_22 = arith.constant 0 : index
    %c0_23 = arith.constant 0 : index
    %c4 = arith.constant 4 : index
    %c0_24 = arith.constant 0 : index
    %16 = vector.load %arg1[%c0_22, %c0_23, %c4, %c0_24] : memref<2x8x16x16xf32, #tpu.memory_space<vmem>>, vector<1x8x1x16xf32>
    %17 = vector.shape_cast %16 : vector<1x8x1x16xf32> to vector<8x16xf32>
    %c0_25 = arith.constant 0 : index
    %c91 = arith.constant 91 : index
    %18 = vector.load %arg5[%c0_25, %c91] : memref<8x326xf32, #tpu.memory_space<vmem>>, vector<8x16xf32>
    tpu.vector_store %arg5[%c0_25, %c91], %17 {strides = array<i32>} : memref<8x326xf32, #tpu.memory_space<vmem>>, vector<8x16xf32>,
    %c0_26 = arith.constant 0 : index
    %c0_27 = arith.constant 0 : index
    %c5 = arith.constant 5 : index
    %c0_28 = arith.constant 0 : index
    %19 = vector.load %arg1[%c0_26, %c0_27, %c5, %c0_28] : memref<2x8x16x16xf32, #tpu.memory_space<vmem>>, vector<1x8x1x16xf32>
    %20 = vector.shape_cast %19 : vector<1x8x1x16xf32> to vector<8x16xf32>
    %c0_29 = arith.constant 0 : index
    %c109 = arith.constant 109 : index
    %21 = vector.load %arg5[%c0_29, %c109] : memref<8x326xf32, #tpu.memory_space<vmem>>, vector<8x16xf32>
    tpu.vector_store %arg5[%c0_29, %c109], %20 {strides = array<i32>} : memref<8x326xf32, #tpu.memory_space<vmem>>, vector<8x16xf32>,
    %c0_30 = arith.constant 0 : index
    %c0_31 = arith.constant 0 : index
    %c6 = arith.constant 6 : index
    %c0_32 = arith.constant 0 : index
    %22 = vector.load %arg1[%c0_30, %c0_31, %c6, %c0_32] : memref<2x8x16x16xf32, #tpu.memory_space<vmem>>, vector<1x8x1x16xf32>
    %23 = vector.shape_cast %22 : vector<1x8x1x16xf32> to vector<8x16xf32>
    %c0_33 = arith.constant 0 : index
    %c127 = arith.constant 127 : index
    %24 = vector.load %arg5[%c0_33, %c127] : memref<8x326xf32, #tpu.memory_space<vmem>>, vector<8x16xf32>
    tpu.vector_store %arg5[%c0_33, %c127], %23 {strides = array<i32>} : memref<8x326xf32, #tpu.memory_space<vmem>>, vector<8x16xf32>,
    %c0_34 = arith.constant 0 : index
    %c0_35 = arith.constant 0 : index
    %c7 = arith.constant 7 : index
    %c0_36 = arith.constant 0 : index
    %25 = vector.load %arg1[%c0_34, %c0_35, %c7, %c0_36] : memref<2x8x16x16xf32, #tpu.memory_space<vmem>>, vector<1x8x1x16xf32>
    %26 = vector.shape_cast %25 : vector<1x8x1x16xf32> to vector<8x16xf32>
    %c0_37 = arith.constant 0 : index
    %c145 = arith.constant 145 : index
    %27 = vector.load %arg5[%c0_37, %c145] : memref<8x326xf32, #tpu.memory_space<vmem>>, vector<8x16xf32>
    tpu.vector_store %arg5[%c0_37, %c145], %26 {strides = array<i32>} : memref<8x326xf32, #tpu.memory_space<vmem>>, vector<8x16xf32>,
    %c0_38 = arith.constant 0 : index
    %c0_39 = arith.constant 0 : index
    %c8 = arith.constant 8 : index
    %c0_40 = arith.constant 0 : index
    %28 = vector.load %arg1[%c0_38, %c0_39, %c8, %c0_40] : memref<2x8x16x16xf32, #tpu.memory_space<vmem>>, vector<1x8x1x16xf32>
    %29 = vector.shape_cast %28 : vector<1x8x1x16xf32> to vector<8x16xf32>
    %c0_41 = arith.constant 0 : index
    %c163 = arith.constant 163 : index
    %30 = vector.load %arg5[%c0_41, %c163] : memref<8x326xf32, #tpu.memory_space<vmem>>, vector<8x16xf32>
    tpu.vector_store %arg5[%c0_41, %c163], %29 {strides = array<i32>} : memref<8x326xf32, #tpu.memory_space<vmem>>, vector<8x16xf32>,
    %c0_42 = arith.constant 0 : index
    %c0_43 = arith.constant 0 : index
    %c9 = arith.constant 9 : index
    %c0_44 = arith.constant 0 : index
    %31 = vector.load %arg1[%c0_42, %c0_43, %c9, %c0_44] : memref<2x8x16x16xf32, #tpu.memory_space<vmem>>, vector<1x8x1x16xf32>
    %32 = vector.shape_cast %31 : vector<1x8x1x16xf32> to vector<8x16xf32>
    %c0_45 = arith.constant 0 : index
    %c181 = arith.constant 181 : index
    %33 = vector.load %arg5[%c0_45, %c181] : memref<8x326xf32, #tpu.memory_space<vmem>>, vector<8x16xf32>
    tpu.vector_store %arg5[%c0_45, %c181], %32 {strides = array<i32>} : memref<8x326xf32, #tpu.memory_space<vmem>>, vector<8x16xf32>,
    %c0_46 = arith.constant 0 : index
    %c0_47 = arith.constant 0 : index
    %c10 = arith.constant 10 : index
    %c0_48 = arith.constant 0 : index
    %34 = vector.load %arg1[%c0_46, %c0_47, %c10, %c0_48] : memref<2x8x16x16xf32, #tpu.memory_space<vmem>>, vector<1x8x1x16xf32>
    %35 = vector.shape_cast %34 : vector<1x8x1x16xf32> to vector<8x16xf32>
    %c0_49 = arith.constant 0 : index
    %c199 = arith.constant 199 : index
    %36 = vector.load %arg5[%c0_49, %c199] : memref<8x326xf32, #tpu.memory_space<vmem>>, vector<8x16xf32>
    tpu.vector_store %arg5[%c0_49, %c199], %35 {strides = array<i32>} : memref<8x326xf32, #tpu.memory_space<vmem>>, vector<8x16xf32>,
    %c0_50 = arith.constant 0 : index
    %c0_51 = arith.constant 0 : index
    %c11 = arith.constant 11 : index
    %c0_52 = arith.constant 0 : index
    %37 = vector.load %arg1[%c0_50, %c0_51, %c11, %c0_52] : memref<2x8x16x16xf32, #tpu.memory_space<vmem>>, vector<1x8x1x16xf32>
    %38 = vector.shape_cast %37 : vector<1x8x1x16xf32> to vector<8x16xf32>
    %c0_53 = arith.constant 0 : index
    %c217 = arith.constant 217 : index
    %39 = vector.load %arg5[%c0_53, %c217] : memref<8x326xf32, #tpu.memory_space<vmem>>, vector<8x16xf32>
    tpu.vector_store %arg5[%c0_53, %c217], %38 {strides = array<i32>} : memref<8x326xf32, #tpu.memory_space<vmem>>, vector<8x16xf32>,
    %c0_54 = arith.constant 0 : index
    %c0_55 = arith.constant 0 : index
    %c12 = arith.constant 12 : index
    %c0_56 = arith.constant 0 : index
    %40 = vector.load %arg1[%c0_54, %c0_55, %c12, %c0_56] : memref<2x8x16x16xf32, #tpu.memory_space<vmem>>, vector<1x8x1x16xf32>
    %41 = vector.shape_cast %40 : vector<1x8x1x16xf32> to vector<8x16xf32>
    %c0_57 = arith.constant 0 : index
    %c235 = arith.constant 235 : index
    %42 = vector.load %arg5[%c0_57, %c235] : memref<8x326xf32, #tpu.memory_space<vmem>>, vector<8x16xf32>
    tpu.vector_store %arg5[%c0_57, %c235], %41 {strides = array<i32>} : memref<8x326xf32, #tpu.memory_space<vmem>>, vector<8x16xf32>,
    %c0_58 = arith.constant 0 : index
    %c0_59 = arith.constant 0 : index
    %c13 = arith.constant 13 : index
    %c0_60 = arith.constant 0 : index
    %43 = vector.load %arg1[%c0_58, %c0_59, %c13, %c0_60] : memref<2x8x16x16xf32, #tpu.memory_space<vmem>>, vector<1x8x1x16xf32>
    %44 = vector.shape_cast %43 : vector<1x8x1x16xf32> to vector<8x16xf32>
    %c0_61 = arith.constant 0 : index
    %c253 = arith.constant 253 : index
    %45 = vector.load %arg5[%c0_61, %c253] : memref<8x326xf32, #tpu.memory_space<vmem>>, vector<8x16xf32>
    tpu.vector_store %arg5[%c0_61, %c253], %44 {strides = array<i32>} : memref<8x326xf32, #tpu.memory_space<vmem>>, vector<8x16xf32>,
    %c0_62 = arith.constant 0 : index
    %c0_63 = arith.constant 0 : index
    %c14 = arith.constant 14 : index
    %c0_64 = arith.constant 0 : index
    %46 = vector.load %arg1[%c0_62, %c0_63, %c14, %c0_64] : memref<2x8x16x16xf32, #tpu.memory_space<vmem>>, vector<1x8x1x16xf32>
    %47 = vector.shape_cast %46 : vector<1x8x1x16xf32> to vector<8x16xf32>
    %c0_65 = arith.constant 0 : index
    %c271 = arith.constant 271 : index
    %48 = vector.load %arg5[%c0_65, %c271] : memref<8x326xf32, #tpu.memory_space<vmem>>, vector<8x16xf32>
    tpu.vector_store %arg5[%c0_65, %c271], %47 {strides = array<i32>} : memref<8x326xf32, #tpu.memory_space<vmem>>, vector<8x16xf32>,
    %c0_66 = arith.constant 0 : index
    %c0_67 = arith.constant 0 : index
    %c15 = arith.constant 15 : index
    %c0_68 = arith.constant 0 : index
    %49 = vector.load %arg1[%c0_66, %c0_67, %c15, %c0_68] : memref<2x8x16x16xf32, #tpu.memory_space<vmem>>, vector<1x8x1x16xf32>
    %50 = vector.shape_cast %49 : vector<1x8x1x16xf32> to vector<8x16xf32>
    %c0_69 = arith.constant 0 : index
    %c289 = arith.constant 289 : index
    %51 = vector.load %arg5[%c0_69, %c289] : memref<8x326xf32, #tpu.memory_space<vmem>>, vector<8x16xf32>
    tpu.vector_store %arg5[%c0_69, %c289], %50 {strides = array<i32>} : memref<8x326xf32, #tpu.memory_space<vmem>>, vector<8x16xf32>,
    %c0_70 = arith.constant 0 : index
    %c0_71 = arith.constant 0 : index
    %52 = vector.load %arg5[%c0_70, %c0_71] : memref<8x326xf32, #tpu.memory_space<vmem>>, vector<8x288xf32>
    %c0_72 = arith.constant 0 : index
    %c0_73 = arith.constant 0 : index
    %53 = vector.load %arg6[%c0_72, %c0_73] : memref<72x288xf32, #tpu.memory_space<vmem>>, vector<8x288xf32>
    tpu.vector_store %arg6[%c0_72, %c0_73], %52 {strides = array<i32>} : memref<72x288xf32, #tpu.memory_space<vmem>>, vector<8x288xf32>,
    %c0_74 = arith.constant 0 : index
    %c1_75 = arith.constant 1 : index
    %54 = vector.load %arg5[%c0_74, %c1_75] : memref<8x326xf32, #tpu.memory_space<vmem>>, vector<8x288xf32>
    %c8_76 = arith.constant 8 : index
    %c0_77 = arith.constant 0 : index
    %55 = vector.load %arg6[%c8_76, %c0_77] : memref<72x288xf32, #tpu.memory_space<vmem>>, vector<8x288xf32>
    tpu.vector_store %arg6[%c8_76, %c0_77], %54 {strides = array<i32>} : memref<72x288xf32, #tpu.memory_space<vmem>>, vector<8x288xf32>,
    %c0_78 = arith.constant 0 : index
    %c2_79 = arith.constant 2 : index
    %56 = vector.load %arg5[%c0_78, %c2_79] : memref<8x326xf32, #tpu.memory_space<vmem>>, vector<8x288xf32>
    %c16 = arith.constant 16 : index
    %c0_80 = arith.constant 0 : index
    %57 = vector.load %arg6[%c16, %c0_80] : memref<72x288xf32, #tpu.memory_space<vmem>>, vector<8x288xf32>
    tpu.vector_store %arg6[%c16, %c0_80], %56 {strides = array<i32>} : memref<72x288xf32, #tpu.memory_space<vmem>>, vector<8x288xf32>,
    %c0_81 = arith.constant 0 : index
    %c18 = arith.constant 18 : index
    %58 = vector.load %arg5[%c0_81, %c18] : memref<8x326xf32, #tpu.memory_space<vmem>>, vector<8x288xf32>
    %c24 = arith.constant 24 : index
    %c0_82 = arith.constant 0 : index
    %59 = vector.load %arg6[%c24, %c0_82] : memref<72x288xf32, #tpu.memory_space<vmem>>, vector<8x288xf32>
    tpu.vector_store %arg6[%c24, %c0_82], %58 {strides = array<i32>} : memref<72x288xf32, #tpu.memory_space<vmem>>, vector<8x288xf32>,
    %c0_83 = arith.constant 0 : index
    %c19_84 = arith.constant 19 : index
    %60 = vector.load %arg5[%c0_83, %c19_84] : memref<8x326xf32, #tpu.memory_space<vmem>>, vector<8x288xf32>
    %c32 = arith.constant 32 : index
    %c0_85 = arith.constant 0 : index
    %61 = vector.load %arg6[%c32, %c0_85] : memref<72x288xf32, #tpu.memory_space<vmem>>, vector<8x288xf32>
    tpu.vector_store %arg6[%c32, %c0_85], %60 {strides = array<i32>} : memref<72x288xf32, #tpu.memory_space<vmem>>, vector<8x288xf32>,
    %c0_86 = arith.constant 0 : index
    %c20 = arith.constant 20 : index
    %62 = vector.load %arg5[%c0_86, %c20] : memref<8x326xf32, #tpu.memory_space<vmem>>, vector<8x288xf32>
    %c40 = arith.constant 40 : index
    %c0_87 = arith.constant 0 : index
    %63 = vector.load %arg6[%c40, %c0_87] : memref<72x288xf32, #tpu.memory_space<vmem>>, vector<8x288xf32>
    tpu.vector_store %arg6[%c40, %c0_87], %62 {strides = array<i32>} : memref<72x288xf32, #tpu.memory_space<vmem>>, vector<8x288xf32>,
    %c0_88 = arith.constant 0 : index
    %c36 = arith.constant 36 : index
    %64 = vector.load %arg5[%c0_88, %c36] : memref<8x326xf32, #tpu.memory_space<vmem>>, vector<8x288xf32>
    %c48 = arith.constant 48 : index
    %c0_89 = arith.constant 0 : index
    %65 = vector.load %arg6[%c48, %c0_89] : memref<72x288xf32, #tpu.memory_space<vmem>>, vector<8x288xf32>
    tpu.vector_store %arg6[%c48, %c0_89], %64 {strides = array<i32>} : memref<72x288xf32, #tpu.memory_space<vmem>>, vector<8x288xf32>,
    %c0_90 = arith.constant 0 : index
    %c37_91 = arith.constant 37 : index
    %66 = vector.load %arg5[%c0_90, %c37_91] : memref<8x326xf32, #tpu.memory_space<vmem>>, vector<8x288xf32>
    %c56 = arith.constant 56 : index
    %c0_92 = arith.constant 0 : index
    %67 = vector.load %arg6[%c56, %c0_92] : memref<72x288xf32, #tpu.memory_space<vmem>>, vector<8x288xf32>
    tpu.vector_store %arg6[%c56, %c0_92], %66 {strides = array<i32>} : memref<72x288xf32, #tpu.memory_space<vmem>>, vector<8x288xf32>,
    %c0_93 = arith.constant 0 : index
    %c38 = arith.constant 38 : index
    %68 = vector.load %arg5[%c0_93, %c38] : memref<8x326xf32, #tpu.memory_space<vmem>>, vector<8x288xf32>
    %c64 = arith.constant 64 : index
    %c0_94 = arith.constant 0 : index
    %69 = vector.load %arg6[%c64, %c0_94] : memref<72x288xf32, #tpu.memory_space<vmem>>, vector<8x288xf32>
    tpu.vector_store %arg6[%c64, %c0_94], %68 {strides = array<i32>} : memref<72x288xf32, #tpu.memory_space<vmem>>, vector<8x288xf32>,
    %c0_95 = arith.constant 0 : index
    %c0_96 = arith.constant 0 : index
    %70 = vector.load %arg6[%c0_95, %c0_96] : memref<72x288xf32, #tpu.memory_space<vmem>>, vector<72x288xf32>
    %cst_97 = arith.constant dense<0.000000e+00> : vector<4x288xf32>
    %71 = tpu.matmul %2, %70, %cst_97 {dimension_numbers = #tpu.dot_dimension_numbers<[1], [0], [0], [1], [0, 0, 1, 1], [], []>} : vector<4x72xf32>, vector<72x288xf32>, vector<4x288xf32> -> vector<4x288xf32>
    %cst_98 = arith.constant dense<0.000000e+00> : vector<4x256xf32>
    %72 = tpu.matmul %71, %3, %cst_98 {dimension_numbers = #tpu.dot_dimension_numbers<[1], [0], [0], [1], [0, 0, 1, 1], [], []>} : vector<4x288xf32>, vector<288x256xf32>, vector<4x256xf32> -> vector<4x256xf32>
    %c0_99 = arith.constant 0 : index
    %c0_100 = arith.constant 0 : index
    %c0_101 = arith.constant 0 : index
    %73 = vector.load %arg4[%c0_99, %c0_100, %c0_101] : memref<2x4x256xf32, #tpu.memory_space<vmem>>, vector<1x4x256xf32>
    %74 = vector.shape_cast %73 : vector<1x4x256xf32> to vector<4x256xf32>
    %75 = vector.shape_cast %72 : vector<4x256xf32> to vector<1x4x256xf32>
    tpu.vector_store %arg4[%c0_99, %c0_100, %c0_101], %75 {strides = array<i32>} : memref<2x4x256xf32, #tpu.memory_space<vmem>>, vector<1x4x256xf32>,
    %c1_102 = arith.constant 1 : index
    %c0_103 = arith.constant 0 : index
    %c0_104 = arith.constant 0 : index
    %c0_105 = arith.constant 0 : index
    %76 = vector.load %arg1[%c1_102, %c0_103, %c0_104, %c0_105] : memref<2x8x16x16xf32, #tpu.memory_space<vmem>>, vector<1x8x1x16xf32>
    %77 = vector.shape_cast %76 : vector<1x8x1x16xf32> to vector<8x16xf32>
    %c0_106 = arith.constant 0 : index
    %c19_107 = arith.constant 19 : index
    %78 = vector.load %arg5[%c0_106, %c19_107] : memref<8x326xf32, #tpu.memory_space<vmem>>, vector<8x16xf32>
    tpu.vector_store %arg5[%c0_106, %c19_107], %77 {strides = array<i32>} : memref<8x326xf32, #tpu.memory_space<vmem>>, vector<8x16xf32>,
    %c1_108 = arith.constant 1 : index
    %c0_109 = arith.constant 0 : index
    %c1_110 = arith.constant 1 : index
    %c0_111 = arith.constant 0 : index
    %79 = vector.load %arg1[%c1_108, %c0_109, %c1_110, %c0_111] : memref<2x8x16x16xf32, #tpu.memory_space<vmem>>, vector<1x8x1x16xf32>
    %80 = vector.shape_cast %79 : vector<1x8x1x16xf32> to vector<8x16xf32>
    %c0_112 = arith.constant 0 : index
    %c37_113 = arith.constant 37 : index
    %81 = vector.load %arg5[%c0_112, %c37_113] : memref<8x326xf32, #tpu.memory_space<vmem>>, vector<8x16xf32>
    tpu.vector_store %arg5[%c0_112, %c37_113], %80 {strides = array<i32>} : memref<8x326xf32, #tpu.memory_space<vmem>>, vector<8x16xf32>,
    %c1_114 = arith.constant 1 : index
    %c0_115 = arith.constant 0 : index
    %c2_116 = arith.constant 2 : index
    %c0_117 = arith.constant 0 : index
    %82 = vector.load %arg1[%c1_114, %c0_115, %c2_116, %c0_117] : memref<2x8x16x16xf32, #tpu.memory_space<vmem>>, vector<1x8x1x16xf32>
    %83 = vector.shape_cast %82 : vector<1x8x1x16xf32> to vector<8x16xf32>
    %c0_118 = arith.constant 0 : index
    %c55_119 = arith.constant 55 : index
    %84 = vector.load %arg5[%c0_118, %c55_119] : memref<8x326xf32, #tpu.memory_space<vmem>>, vector<8x16xf32>
    tpu.vector_store %arg5[%c0_118, %c55_119], %83 {strides = array<i32>} : memref<8x326xf32, #tpu.memory_space<vmem>>, vector<8x16xf32>,
    %c1_120 = arith.constant 1 : index
    %c0_121 = arith.constant 0 : index
    %c3_122 = arith.constant 3 : index
    %c0_123 = arith.constant 0 : index
    %85 = vector.load %arg1[%c1_120, %c0_121, %c3_122, %c0_123] : memref<2x8x16x16xf32, #tpu.memory_space<vmem>>, vector<1x8x1x16xf32>
    %86 = vector.shape_cast %85 : vector<1x8x1x16xf32> to vector<8x16xf32>
    %c0_124 = arith.constant 0 : index
    %c73_125 = arith.constant 73 : index
    %87 = vector.load %arg5[%c0_124, %c73_125] : memref<8x326xf32, #tpu.memory_space<vmem>>, vector<8x16xf32>
    tpu.vector_store %arg5[%c0_124, %c73_125], %86 {strides = array<i32>} : memref<8x326xf32, #tpu.memory_space<vmem>>, vector<8x16xf32>,
    %c1_126 = arith.constant 1 : index
    %c0_127 = arith.constant 0 : index
    %c4_128 = arith.constant 4 : index
    %c0_129 = arith.constant 0 : index
    %88 = vector.load %arg1[%c1_126, %c0_127, %c4_128, %c0_129] : memref<2x8x16x16xf32, #tpu.memory_space<vmem>>, vector<1x8x1x16xf32>
    %89 = vector.shape_cast %88 : vector<1x8x1x16xf32> to vector<8x16xf32>
    %c0_130 = arith.constant 0 : index
    %c91_131 = arith.constant 91 : index
    %90 = vector.load %arg5[%c0_130, %c91_131] : memref<8x326xf32, #tpu.memory_space<vmem>>, vector<8x16xf32>
    tpu.vector_store %arg5[%c0_130, %c91_131], %89 {strides = array<i32>} : memref<8x326xf32, #tpu.memory_space<vmem>>, vector<8x16xf32>,
    %c1_132 = arith.constant 1 : index
    %c0_133 = arith.constant 0 : index
    %c5_134 = arith.constant 5 : index
    %c0_135 = arith.constant 0 : index
    %91 = vector.load %arg1[%c1_132, %c0_133, %c5_134, %c0_135] : memref<2x8x16x16xf32, #tpu.memory_space<vmem>>, vector<1x8x1x16xf32>
    %92 = vector.shape_cast %91 : vector<1x8x1x16xf32> to vector<8x16xf32>
    %c0_136 = arith.constant 0 : index
    %c109_137 = arith.constant 109 : index
    %93 = vector.load %arg5[%c0_136, %c109_137] : memref<8x326xf32, #tpu.memory_space<vmem>>, vector<8x16xf32>
    tpu.vector_store %arg5[%c0_136, %c109_137], %92 {strides = array<i32>} : memref<8x326xf32, #tpu.memory_space<vmem>>, vector<8x16xf32>,
    %c1_138 = arith.constant 1 : index
    %c0_139 = arith.constant 0 : index
    %c6_140 = arith.constant 6 : index
    %c0_141 = arith.constant 0 : index
    %94 = vector.load %arg1[%c1_138, %c0_139, %c6_140, %c0_141] : memref<2x8x16x16xf32, #tpu.memory_space<vmem>>, vector<1x8x1x16xf32>
    %95 = vector.shape_cast %94 : vector<1x8x1x16xf32> to vector<8x16xf32>
    %c0_142 = arith.constant 0 : index
    %c127_143 = arith.constant 127 : index
    %96 = vector.load %arg5[%c0_142, %c127_143] : memref<8x326xf32, #tpu.memory_space<vmem>>, vector<8x16xf32>
    tpu.vector_store %arg5[%c0_142, %c127_143], %95 {strides = array<i32>} : memref<8x326xf32, #tpu.memory_space<vmem>>, vector<8x16xf32>,
    %c1_144 = arith.constant 1 : index
    %c0_145 = arith.constant 0 : index
    %c7_146 = arith.constant 7 : index
    %c0_147 = arith.constant 0 : index
    %97 = vector.load %arg1[%c1_144, %c0_145, %c7_146, %c0_147] : memref<2x8x16x16xf32, #tpu.memory_space<vmem>>, vector<1x8x1x16xf32>
    %98 = vector.shape_cast %97 : vector<1x8x1x16xf32> to vector<8x16xf32>
    %c0_148 = arith.constant 0 : index
    %c145_149 = arith.constant 145 : index
    %99 = vector.load %arg5[%c0_148, %c145_149] : memref<8x326xf32, #tpu.memory_space<vmem>>, vector<8x16xf32>
    tpu.vector_store %arg5[%c0_148, %c145_149], %98 {strides = array<i32>} : memref<8x326xf32, #tpu.memory_space<vmem>>, vector<8x16xf32>,
    %c1_150 = arith.constant 1 : index
    %c0_151 = arith.constant 0 : index
    %c8_152 = arith.constant 8 : index
    %c0_153 = arith.constant 0 : index
    %100 = vector.load %arg1[%c1_150, %c0_151, %c8_152, %c0_153] : memref<2x8x16x16xf32, #tpu.memory_space<vmem>>, vector<1x8x1x16xf32>
    %101 = vector.shape_cast %100 : vector<1x8x1x16xf32> to vector<8x16xf32>
    %c0_154 = arith.constant 0 : index
    %c163_155 = arith.constant 163 : index
    %102 = vector.load %arg5[%c0_154, %c163_155] : memref<8x326xf32, #tpu.memory_space<vmem>>, vector<8x16xf32>
    tpu.vector_store %arg5[%c0_154, %c163_155], %101 {strides = array<i32>} : memref<8x326xf32, #tpu.memory_space<vmem>>, vector<8x16xf32>,
    %c1_156 = arith.constant 1 : index
    %c0_157 = arith.constant 0 : index
    %c9_158 = arith.constant 9 : index
    %c0_159 = arith.constant 0 : index
    %103 = vector.load %arg1[%c1_156, %c0_157, %c9_158, %c0_159] : memref<2x8x16x16xf32, #tpu.memory_space<vmem>>, vector<1x8x1x16xf32>
    %104 = vector.shape_cast %103 : vector<1x8x1x16xf32> to vector<8x16xf32>
    %c0_160 = arith.constant 0 : index
    %c181_161 = arith.constant 181 : index
    %105 = vector.load %arg5[%c0_160, %c181_161] : memref<8x326xf32, #tpu.memory_space<vmem>>, vector<8x16xf32>
    tpu.vector_store %arg5[%c0_160, %c181_161], %104 {strides = array<i32>} : memref<8x326xf32, #tpu.memory_space<vmem>>, vector<8x16xf32>,
    %c1_162 = arith.constant 1 : index
    %c0_163 = arith.constant 0 : index
    %c10_164 = arith.constant 10 : index
    %c0_165 = arith.constant 0 : index
    %106 = vector.load %arg1[%c1_162, %c0_163, %c10_164, %c0_165] : memref<2x8x16x16xf32, #tpu.memory_space<vmem>>, vector<1x8x1x16xf32>
    %107 = vector.shape_cast %106 : vector<1x8x1x16xf32> to vector<8x16xf32>
    %c0_166 = arith.constant 0 : index
    %c199_167 = arith.constant 199 : index
    %108 = vector.load %arg5[%c0_166, %c199_167] : memref<8x326xf32, #tpu.memory_space<vmem>>, vector<8x16xf32>
    tpu.vector_store %arg5[%c0_166, %c199_167], %107 {strides = array<i32>} : memref<8x326xf32, #tpu.memory_space<vmem>>, vector<8x16xf32>,
    %c1_168 = arith.constant 1 : index
    %c0_169 = arith.constant 0 : index
    %c11_170 = arith.constant 11 : index
    %c0_171 = arith.constant 0 : index
    %109 = vector.load %arg1[%c1_168, %c0_169, %c11_170, %c0_171] : memref<2x8x16x16xf32, #tpu.memory_space<vmem>>, vector<1x8x1x16xf32>
    %110 = vector.shape_cast %109 : vector<1x8x1x16xf32> to vector<8x16xf32>
    %c0_172 = arith.constant 0 : index
    %c217_173 = arith.constant 217 : index
    %111 = vector.load %arg5[%c0_172, %c217_173] : memref<8x326xf32, #tpu.memory_space<vmem>>, vector<8x16xf32>
    tpu.vector_store %arg5[%c0_172, %c217_173], %110 {strides = array<i32>} : memref<8x326xf32, #tpu.memory_space<vmem>>, vector<8x16xf32>,
    %c1_174 = arith.constant 1 : index
    %c0_175 = arith.constant 0 : index
    %c12_176 = arith.constant 12 : index
    %c0_177 = arith.constant 0 : index
    %112 = vector.load %arg1[%c1_174, %c0_175, %c12_176, %c0_177] : memref<2x8x16x16xf32, #tpu.memory_space<vmem>>, vector<1x8x1x16xf32>
    %113 = vector.shape_cast %112 : vector<1x8x1x16xf32> to vector<8x16xf32>
    %c0_178 = arith.constant 0 : index
    %c235_179 = arith.constant 235 : index
    %114 = vector.load %arg5[%c0_178, %c235_179] : memref<8x326xf32, #tpu.memory_space<vmem>>, vector<8x16xf32>
    tpu.vector_store %arg5[%c0_178, %c235_179], %113 {strides = array<i32>} : memref<8x326xf32, #tpu.memory_space<vmem>>, vector<8x16xf32>,
    %c1_180 = arith.constant 1 : index
    %c0_181 = arith.constant 0 : index
    %c13_182 = arith.constant 13 : index
    %c0_183 = arith.constant 0 : index
    %115 = vector.load %arg1[%c1_180, %c0_181, %c13_182, %c0_183] : memref<2x8x16x16xf32, #tpu.memory_space<vmem>>, vector<1x8x1x16xf32>
    %116 = vector.shape_cast %115 : vector<1x8x1x16xf32> to vector<8x16xf32>
    %c0_184 = arith.constant 0 : index
    %c253_185 = arith.constant 253 : index
    %117 = vector.load %arg5[%c0_184, %c253_185] : memref<8x326xf32, #tpu.memory_space<vmem>>, vector<8x16xf32>
    tpu.vector_store %arg5[%c0_184, %c253_185], %116 {strides = array<i32>} : memref<8x326xf32, #tpu.memory_space<vmem>>, vector<8x16xf32>,
    %c1_186 = arith.constant 1 : index
    %c0_187 = arith.constant 0 : index
    %c14_188 = arith.constant 14 : index
    %c0_189 = arith.constant 0 : index
    %118 = vector.load %arg1[%c1_186, %c0_187, %c14_188, %c0_189] : memref<2x8x16x16xf32, #tpu.memory_space<vmem>>, vector<1x8x1x16xf32>
    %119 = vector.shape_cast %118 : vector<1x8x1x16xf32> to vector<8x16xf32>
    %c0_190 = arith.constant 0 : index
    %c271_191 = arith.constant 271 : index
    %120 = vector.load %arg5[%c0_190, %c271_191] : memref<8x326xf32, #tpu.memory_space<vmem>>, vector<8x16xf32>
    tpu.vector_store %arg5[%c0_190, %c271_191], %119 {strides = array<i32>} : memref<8x326xf32, #tpu.memory_space<vmem>>, vector<8x16xf32>,
    %c1_192 = arith.constant 1 : index
    %c0_193 = arith.constant 0 : index
    %c15_194 = arith.constant 15 : index
    %c0_195 = arith.constant 0 : index
    %121 = vector.load %arg1[%c1_192, %c0_193, %c15_194, %c0_195] : memref<2x8x16x16xf32, #tpu.memory_space<vmem>>, vector<1x8x1x16xf32>
    %122 = vector.shape_cast %121 : vector<1x8x1x16xf32> to vector<8x16xf32>
    %c0_196 = arith.constant 0 : index
    %c289_197 = arith.constant 289 : index
    %123 = vector.load %arg5[%c0_196, %c289_197] : memref<8x326xf32, #tpu.memory_space<vmem>>, vector<8x16xf32>
    tpu.vector_store %arg5[%c0_196, %c289_197], %122 {strides = array<i32>} : memref<8x326xf32, #tpu.memory_space<vmem>>, vector<8x16xf32>,
    %c0_198 = arith.constant 0 : index
    %c0_199 = arith.constant 0 : index
    %124 = vector.load %arg5[%c0_198, %c0_199] : memref<8x326xf32, #tpu.memory_space<vmem>>, vector<8x288xf32>
    %c0_200 = arith.constant 0 : index
    %c0_201 = arith.constant 0 : index
    %125 = vector.load %arg6[%c0_200, %c0_201] : memref<72x288xf32, #tpu.memory_space<vmem>>, vector<8x288xf32>
    tpu.vector_store %arg6[%c0_200, %c0_201], %124 {strides = array<i32>} : memref<72x288xf32, #tpu.memory_space<vmem>>, vector<8x288xf32>,
    %c0_202 = arith.constant 0 : index
    %c1_203 = arith.constant 1 : index
    %126 = vector.load %arg5[%c0_202, %c1_203] : memref<8x326xf32, #tpu.memory_space<vmem>>, vector<8x288xf32>
    %c8_204 = arith.constant 8 : index
    %c0_205 = arith.constant 0 : index
    %127 = vector.load %arg6[%c8_204, %c0_205] : memref<72x288xf32, #tpu.memory_space<vmem>>, vector<8x288xf32>
    tpu.vector_store %arg6[%c8_204, %c0_205], %126 {strides = array<i32>} : memref<72x288xf32, #tpu.memory_space<vmem>>, vector<8x288xf32>,
    %c0_206 = arith.constant 0 : index
    %c2_207 = arith.constant 2 : index
    %128 = vector.load %arg5[%c0_206, %c2_207] : memref<8x326xf32, #tpu.memory_space<vmem>>, vector<8x288xf32>
    %c16_208 = arith.constant 16 : index
    %c0_209 = arith.constant 0 : index
    %129 = vector.load %arg6[%c16_208, %c0_209] : memref<72x288xf32, #tpu.memory_space<vmem>>, vector<8x288xf32>
    tpu.vector_store %arg6[%c16_208, %c0_209], %128 {strides = array<i32>} : memref<72x288xf32, #tpu.memory_space<vmem>>, vector<8x288xf32>,
    %c0_210 = arith.constant 0 : index
    %c18_211 = arith.constant 18 : index
    %130 = vector.load %arg5[%c0_210, %c18_211] : memref<8x326xf32, #tpu.memory_space<vmem>>, vector<8x288xf32>
    %c24_212 = arith.constant 24 : index
    %c0_213 = arith.constant 0 : index
    %131 = vector.load %arg6[%c24_212, %c0_213] : memref<72x288xf32, #tpu.memory_space<vmem>>, vector<8x288xf32>
    tpu.vector_store %arg6[%c24_212, %c0_213], %130 {strides = array<i32>} : memref<72x288xf32, #tpu.memory_space<vmem>>, vector<8x288xf32>,
    %c0_214 = arith.constant 0 : index
    %c19_215 = arith.constant 19 : index
    %132 = vector.load %arg5[%c0_214, %c19_215] : memref<8x326xf32, #tpu.memory_space<vmem>>, vector<8x288xf32>
    %c32_216 = arith.constant 32 : index
    %c0_217 = arith.constant 0 : index
    %133 = vector.load %arg6[%c32_216, %c0_217] : memref<72x288xf32, #tpu.memory_space<vmem>>, vector<8x288xf32>
    tpu.vector_store %arg6[%c32_216, %c0_217], %132 {strides = array<i32>} : memref<72x288xf32, #tpu.memory_space<vmem>>, vector<8x288xf32>,
    %c0_218 = arith.constant 0 : index
    %c20_219 = arith.constant 20 : index
    %134 = vector.load %arg5[%c0_218, %c20_219] : memref<8x326xf32, #tpu.memory_space<vmem>>, vector<8x288xf32>
    %c40_220 = arith.constant 40 : index
    %c0_221 = arith.constant 0 : index
    %135 = vector.load %arg6[%c40_220, %c0_221] : memref<72x288xf32, #tpu.memory_space<vmem>>, vector<8x288xf32>
    tpu.vector_store %arg6[%c40_220, %c0_221], %134 {strides = array<i32>} : memref<72x288xf32, #tpu.memory_space<vmem>>, vector<8x288xf32>,
    %c0_222 = arith.constant 0 : index
    %c36_223 = arith.constant 36 : index
    %136 = vector.load %arg5[%c0_222, %c36_223] : memref<8x326xf32, #tpu.memory_space<vmem>>, vector<8x288xf32>
    %c48_224 = arith.constant 48 : index
    %c0_225 = arith.constant 0 : index
    %137 = vector.load %arg6[%c48_224, %c0_225] : memref<72x288xf32, #tpu.memory_space<vmem>>, vector<8x288xf32>
    tpu.vector_store %arg6[%c48_224, %c0_225], %136 {strides = array<i32>} : memref<72x288xf32, #tpu.memory_space<vmem>>, vector<8x288xf32>,
    %c0_226 = arith.constant 0 : index
    %c37_227 = arith.constant 37 : index
    %138 = vector.load %arg5[%c0_226, %c37_227] : memref<8x326xf32, #tpu.memory_space<vmem>>, vector<8x288xf32>
    %c56_228 = arith.constant 56 : index
    %c0_229 = arith.constant 0 : index
    %139 = vector.load %arg6[%c56_228, %c0_229] : memref<72x288xf32, #tpu.memory_space<vmem>>, vector<8x288xf32>
    tpu.vector_store %arg6[%c56_228, %c0_229], %138 {strides = array<i32>} : memref<72x288xf32, #tpu.memory_space<vmem>>, vector<8x288xf32>,
    %c0_230 = arith.constant 0 : index
    %c38_231 = arith.constant 38 : index
    %140 = vector.load %arg5[%c0_230, %c38_231] : memref<8x326xf32, #tpu.memory_space<vmem>>, vector<8x288xf32>
    %c64_232 = arith.constant 64 : index
    %c0_233 = arith.constant 0 : index
    %141 = vector.load %arg6[%c64_232, %c0_233] : memref<72x288xf32, #tpu.memory_space<vmem>>, vector<8x288xf32>
    tpu.vector_store %arg6[%c64_232, %c0_233], %140 {strides = array<i32>} : memref<72x288xf32, #tpu.memory_space<vmem>>, vector<8x288xf32>,
    %c0_234 = arith.constant 0 : index
    %c0_235 = arith.constant 0 : index
    %142 = vector.load %arg6[%c0_234, %c0_235] : memref<72x288xf32, #tpu.memory_space<vmem>>, vector<72x288xf32>
    %cst_236 = arith.constant dense<0.000000e+00> : vector<4x288xf32>
    %143 = tpu.matmul %2, %142, %cst_236 {dimension_numbers = #tpu.dot_dimension_numbers<[1], [0], [0], [1], [0, 0, 1, 1], [], []>} : vector<4x72xf32>, vector<72x288xf32>, vector<4x288xf32> -> vector<4x288xf32>
    %cst_237 = arith.constant dense<0.000000e+00> : vector<4x256xf32>
    %144 = tpu.matmul %143, %3, %cst_237 {dimension_numbers = #tpu.dot_dimension_numbers<[1], [0], [0], [1], [0, 0, 1, 1], [], []>} : vector<4x288xf32>, vector<288x256xf32>, vector<4x256xf32> -> vector<4x256xf32>
    %c1_238 = arith.constant 1 : index
    %c0_239 = arith.constant 0 : index
    %c0_240 = arith.constant 0 : index
    %145 = vector.load %arg4[%c1_238, %c0_239, %c0_240] : memref<2x4x256xf32, #tpu.memory_space<vmem>>, vector<1x4x256xf32>
    %146 = vector.shape_cast %145 : vector<1x4x256xf32> to vector<4x256xf32>
    %147 = vector.shape_cast %144 : vector<4x256xf32> to vector<1x4x256xf32>
    tpu.vector_store %arg4[%c1_238, %c0_239, %c0_240], %147 {strides = array<i32>} : memref<2x4x256xf32, #tpu.memory_space<vmem>>, vector<1x4x256xf32>,
    return
  }
  func.func @transform_0(%arg0: i32) -> (i32, i32, i32, i32) {
    %c0_i32 = arith.constant 0 : i32
    %c0_i32_0 = arith.constant 0 : i32
    %c0_i32_1 = arith.constant 0 : i32
    %c0_i32_2 = arith.constant 0 : i32
    %c0_i32_3 = arith.constant 0 : i32
    return %c0_i32, %c0_i32_0, %c0_i32_1, %c0_i32_2 : i32, i32, i32, i32
  }
  func.func @transform_1(%arg0: i32) -> (i32, i32) {
    %c0_i32 = arith.constant 0 : i32
    %c0_i32_0 = arith.constant 0 : i32
    %c0_i32_1 = arith.constant 0 : i32
    return %c0_i32, %c0_i32_0 : i32, i32
  }
  func.func @transform_2(%arg0: i32) -> (i32, i32) {
    %c0_i32 = arith.constant 0 : i32
    %c0_i32_0 = arith.constant 0 : i32
    %c0_i32_1 = arith.constant 0 : i32
    return %c0_i32, %c0_i32_0 : i32, i32
  }
  func.func @transform_3(%arg0: i32) -> (i32, i32, i32) {
    %c0_i32 = arith.constant 0 : i32
    %c0_i32_0 = arith.constant 0 : i32
    %c0_i32_1 = arith.constant 0 : i32
    %c0_i32_2 = arith.constant 0 : i32
    return %c0_i32, %c0_i32_0, %c0_i32_1 : i32, i32, i32
  }
}

</mosaic_0001>

<llo_original>
// kernel: downsample_forward.1
$region0: #{downsample_forward.1}
  #allocation0 [shape = 'u32[]', space=smem, size = 0x4, offset = 0x4, fixed_abs, tag = 'smem constant byte address 0x4 - core index']
  #allocation1 [shape = 'u32[72,128]{1,0:T(1,128)}', space=vmem, size = 0x9000, scoped, tag = 'internal scratch']
  #allocation2 [shape = 'f32[8,326]{1,0:T(8,128)}', space=vmem, size = 0x3000, scoped, tag = 'scratch operand']
  #allocation3 [shape = 'f32[72,288]{1,0:T(8,128)}', space=vmem, size = 0x1b000, scoped, tag = 'scratch operand']
  %s0 = inlined_call_operand.hbm [shape: f32[2,8,16,16], index: 0, kind: input, shape index: {}]
  %s1 = inlined_call_operand.vmem [shape: f32[4,72], index: 1, kind: input, shape index: {}]
  %s2 = inlined_call_operand.hbm [shape: f32[288,256], index: 2, kind: input, shape index: {}]
  %s3 = inlined_call_operand.vmem [shape: f32[2,4,256], index: 3, kind: output, shape index: {}]
  %s4 = sld [smem:[#allocation0]]
  $region30: #{downsample_forward.1} parent=0
    _
  %s6 = ssub.s32 1, %s4
  %s7 = scalar_select 0, %s6, %s4
  $region1: #{downsample_forward.1} parent=0
    #allocation4 [shape = 'u8[131072]{0}', space=vmem, size = 0x20000, scoped, tag = 'input window, operand 0, single buffered']
    #allocation5 [shape = 's32[1]{0}', space=sflag, size = 0x4, scoped, tag = 'scoped memory for downsample_forward.1']
    #allocation6 [shape = 'u8[294912]{0}', space=vmem, size = 0x48000, scoped, tag = 'input window, operand 2, single buffered']
    #allocation7 [shape = 's32[1]{0}', space=sflag, size = 0x4, scoped, tag = 'scoped memory for downsample_forward.1']
    %8 = vsyncpa [#allocation5], 0
    %9 = vsyncpa [#allocation7], 0
    // Predicated region
    $region2: #{downsample_forward.1} parent=1 // pred_check
      _
    $region3: #{downsample_forward.1} parent=1 // pred_check_branch
      %11 = sbr.rel (0) target = $region5
    $region4: #{downsample_forward.1} parent=1 // pred_region
      %13 = vsyncadd [#allocation5], 0
      %s14 = sshll.u32 %s0, 4
      %s15 = int_to_ptr.hbm [resolvable:$true] %s14
      %s16 = sshll.u32 [#allocation4], 4
      %s17 = int_to_ptr.vmem [resolvable:$true] %s16
      %22 = dma.hbm_to_vmem [thread:$0]  %s15, 4096, %s17, [#allocation5], 128, 128, 8
    $region5: #{downsample_forward.1} parent=1 // pred_fallthru
      _
    // Predicated region
    $region6: #{downsample_forward.1} parent=1 // pred_check
      _
    $region7: #{downsample_forward.1} parent=1 // pred_check_branch
      %24 = sbr.rel (0) target = $region9
    $region8: #{downsample_forward.1} parent=1 // pred_region
      _
    $region9: #{downsample_forward.1} parent=1 // pred_fallthru
      _
    // Predicated region
    $region10: #{downsample_forward.1} parent=1 // pred_check
      _
    $region11: #{downsample_forward.1} parent=1 // pred_check_branch
      %26 = sbr.rel (0) target = $region13
    $region12: #{downsample_forward.1} parent=1 // pred_region
      %28 = vsyncadd [#allocation7], 0
      %s29 = sshll.u32 %s2, 4
      %s30 = int_to_ptr.hbm [resolvable:$true] %s29
      %s31 = sshll.u32 [#allocation6], 4
      %s32 = int_to_ptr.vmem [resolvable:$true] %s31
      %37 = dma.hbm_to_vmem [thread:$0]  %s30, 9216, %s32, [#allocation7], 256, 256, 16
    $region13: #{downsample_forward.1} parent=1 // pred_fallthru
      _
    // Predicated region
    $region14: #{downsample_forward.1} parent=1 // pred_check
      _
    $region15: #{downsample_forward.1} parent=1 // pred_check_branch
      %39 = sbr.rel (0) target = $region17
    $region16: #{downsample_forward.1} parent=1 // pred_region
      %41 = dma.done [#allocation5], 4096
    $region17: #{downsample_forward.1} parent=1 // pred_fallthru
      _
    // Predicated region
    $region18: #{downsample_forward.1} parent=1 // pred_check
      _
    $region19: #{downsample_forward.1} parent=1 // pred_check_branch
      %43 = sbr.rel (0) target = $region21
    $region20: #{downsample_forward.1} parent=1 // pred_region
      %45 = dma.done [#allocation7], 9216
    $region21: #{downsample_forward.1} parent=1 // pred_fallthru
      _
    %46 = vst [vmem:[#allocation2] sm:$0xff] 0.0
    %47 = vst [vmem:[#allocation2 + $0x8] sm:$0xff] 0.0
    %vm48 = vcmask 572416
    %49 = vst.msk [vmem:[#allocation2 + $0x10] sm:$0xff] %vm48, 0.0
    %v50 = vld [vmem:[%s1] sm:$0xf]
    %v51 = vld [vmem:[#allocation6] sm:$0xff]
    %v52 = vld [vmem:[#allocation6 + $0x8] sm:$0xff]
    %v53 = vld [vmem:[#allocation6 + $0x10] sm:$0xff]
    %v54 = vld [vmem:[#allocation6 + $0x18] sm:$0xff]
    %v55 = vld [vmem:[#allocation6 + $0x20] sm:$0xff]
    %v56 = vld [vmem:[#allocation6 + $0x28] sm:$0xff]
    %v57 = vld [vmem:[#allocation6 + $0x30] sm:$0xff]
    %v58 = vld [vmem:[#allocation6 + $0x38] sm:$0xff]
    %v59 = vld [vmem:[#allocation6 + $0x40] sm:$0xff]
    %v60 = vld [vmem:[#allocation6 + $0x48] sm:$0xff]
    %v61 = vld [vmem:[#allocation6 + $0x50] sm:$0xff]
    %v62 = vld [vmem:[#allocation6 + $0x58] sm:$0xff]
    %v63 = vld [vmem:[#allocation6 + $0x60] sm:$0xff]
    %v64 = vld [vmem:[#allocation6 + $0x68] sm:$0xff]
    %v65 = vld [vmem:[#allocation6 + $0x70] sm:$0xff]
    %v66 = vld [vmem:[#allocation6 + $0x78] sm:$0xff]
    %v67 = vld [vmem:[#allocation6 + $0x80] sm:$0xff]
    %v68 = vld [vmem:[#allocation6 + $0x88] sm:$0xff]
    %v69 = vld [vmem:[#allocation6 + $0x90] sm:$0xff]
    %v70 = vld [vmem:[#allocation6 + $0x98] sm:$0xff]
    %v71 = vld [vmem:[#allocation6 + $0xa0] sm:$0xff]
    %v72 = vld [vmem:[#allocation6 + $0xa8] sm:$0xff]
    %v73 = vld [vmem:[#allocation6 + $0xb0] sm:$0xff]
    %v74 = vld [vmem:[#allocation6 + $0xb8] sm:$0xff]
    %v75 = vld [vmem:[#allocation6 + $0xc0] sm:$0xff]
    %v76 = vld [vmem:[#allocation6 + $0xc8] sm:$0xff]
    %v77 = vld [vmem:[#allocation6 + $0xd0] sm:$0xff]
    %v78 = vld [vmem:[#allocation6 + $0xd8] sm:$0xff]
    %v79 = vld [vmem:[#allocation6 + $0xe0] sm:$0xff]
    %v80 = vld [vmem:[#allocation6 + $0xe8] sm:$0xff]
    %v81 = vld [vmem:[#allocation6 + $0xf0] sm:$0xff]
    %v82 = vld [vmem:[#allocation6 + $0xf8] sm:$0xff]
    %v83 = vld [vmem:[#allocation6 + $0x100] sm:$0xff]
    %v84 = vld [vmem:[#allocation6 + $0x108] sm:$0xff]
    %v85 = vld [vmem:[#allocation6 + $0x110] sm:$0xff]
    %v86 = vld [vmem:[#allocation6 + $0x118] sm:$0xff]
    %v87 = vld [vmem:[#allocation6 + $0x120] sm:$0xff]
    %v88 = vld [vmem:[#allocation6 + $0x128] sm:$0xff]
    %v89 = vld [vmem:[#allocation6 + $0x130] sm:$0xff]
    %v90 = vld [vmem:[#allocation6 + $0x138] sm:$0xff]
    %v91 = vld [vmem:[#allocation6 + $0x140] sm:$0xff]
    %v92 = vld [vmem:[#allocation6 + $0x148] sm:$0xff]
    %v93 = vld [vmem:[#allocation6 + $0x150] sm:$0xff]
    %v94 = vld [vmem:[#allocation6 + $0x158] sm:$0xff]
    %v95 = vld [vmem:[#allocation6 + $0x160] sm:$0xff]
    %v96 = vld [vmem:[#allocation6 + $0x168] sm:$0xff]
    %v97 = vld [vmem:[#allocation6 + $0x170] sm:$0xff]
    %v98 = vld [vmem:[#allocation6 + $0x178] sm:$0xff]
    %v99 = vld [vmem:[#allocation6 + $0x180] sm:$0xff]
    %v100 = vld [vmem:[#allocation6 + $0x188] sm:$0xff]
    %v101 = vld [vmem:[#allocation6 + $0x190] sm:$0xff]
    %v102 = vld [vmem:[#allocation6 + $0x198] sm:$0xff]
    %v103 = vld [vmem:[#allocation6 + $0x1a0] sm:$0xff]
    %v104 = vld [vmem:[#allocation6 + $0x1a8] sm:$0xff]
    %v105 = vld [vmem:[#allocation6 + $0x1b0] sm:$0xff]
    %v106 = vld [vmem:[#allocation6 + $0x1b8] sm:$0xff]
    %v107 = vld [vmem:[#allocation6 + $0x1c0] sm:$0xff]
    %v108 = vld [vmem:[#allocation6 + $0x1c8] sm:$0xff]
    %v109 = vld [vmem:[#allocation6 + $0x1d0] sm:$0xff]
    %v110 = vld [vmem:[#allocation6 + $0x1d8] sm:$0xff]
    %v111 = vld [vmem:[#allocation6 + $0x1e0] sm:$0xff]
    %v112 = vld [vmem:[#allocation6 + $0x1e8] sm:$0xff]
    %v113 = vld [vmem:[#allocation6 + $0x1f0] sm:$0xff]
    %v114 = vld [vmem:[#allocation6 + $0x1f8] sm:$0xff]
    %v115 = vld [vmem:[#allocation6 + $0x200] sm:$0xff]
    %v116 = vld [vmem:[#allocation6 + $0x208] sm:$0xff]
    %v117 = vld [vmem:[#allocation6 + $0x210] sm:$0xff]
    %v118 = vld [vmem:[#allocation6 + $0x218] sm:$0xff]
    %v119 = vld [vmem:[#allocation6 + $0x220] sm:$0xff]
    %v120 = vld [vmem:[#allocation6 + $0x228] sm:$0xff]
    %v121 = vld [vmem:[#allocation6 + $0x230] sm:$0xff]
    %v122 = vld [vmem:[#allocation6 + $0x238] sm:$0xff]
    %v123 = vld [vmem:[#allocation4] sm:$0x1]
    %v124 = vld [vmem:[#allocation4 + $0x10] sm:$0x1]
    %v125 = vld [vmem:[#allocation4 + $0x20] sm:$0x1]
    %v126 = vld [vmem:[#allocation4 + $0x30] sm:$0x1]
    %v127 = vld [vmem:[#allocation4 + $0x40] sm:$0x1]
    %v128 = vld [vmem:[#allocation4 + $0x50] sm:$0x1]
    %v129 = vld [vmem:[#allocation4 + $0x60] sm:$0x1]
    %v130 = vld [vmem:[#allocation4 + $0x70] sm:$0x1]
    %v139 = vrot.slane %v124, 7
    %vm140 = vcmask 1041409
    %v141 = vsel %vm140, %v139, %v123
    %v142 = vrot.slane %v125, 6
    %vm143 = vcmask 1042434
    %v144 = vsel %vm143, %v142, %v141
    %v145 = vrot.slane %v126, 5
    %vm146 = vcmask 1043459
    %v147 = vsel %vm146, %v145, %v144
    %v148 = vrot.slane %v127, 4
    %vm149 = vcmask 1044484
    %v150 = vsel %vm149, %v148, %v147
    %v151 = vrot.slane %v128, 3
    %vm152 = vcmask 1045509
    %v153 = vsel %vm152, %v151, %v150
    %v154 = vrot.slane %v129, 2
    %vm155 = vcmask 1046534
    %v156 = vsel %vm155, %v154, %v153
    %v157 = vrot.slane %v130, 1
    %vm158 = vcmask 1047559
    %v159 = vsel %vm158, %v157, %v156
    %160 = vrot.lane.b32.xlu0 %v159, 19
    %v161 = vpop.permute.xlu0 %160
    %vm163 = vcmask 285848
    %164 = vst.msk [vmem:[#allocation2] sm:$0xff] %vm163, %v161
    %v165 = vld [vmem:[#allocation4 + $0x1] sm:$0x1]
    %v166 = vld [vmem:[#allocation4 + $0x11] sm:$0x1]
    %v167 = vld [vmem:[#allocation4 + $0x21] sm:$0x1]
    %v168 = vld [vmem:[#allocation4 + $0x31] sm:$0x1]
    %v169 = vld [vmem:[#allocation4 + $0x41] sm:$0x1]
    %v170 = vld [vmem:[#allocation4 + $0x51] sm:$0x1]
    %v171 = vld [vmem:[#allocation4 + $0x61] sm:$0x1]
    %v172 = vld [vmem:[#allocation4 + $0x71] sm:$0x1]
    %v181 = vrot.slane %v166, 7
    %v182 = vsel %vm140, %v181, %v165
    %v183 = vrot.slane %v167, 6
    %v184 = vsel %vm143, %v183, %v182
    %v185 = vrot.slane %v168, 5
    %v186 = vsel %vm146, %v185, %v184
    %v187 = vrot.slane %v169, 4
    %v188 = vsel %vm149, %v187, %v186
    %v189 = vrot.slane %v170, 3
    %v190 = vsel %vm152, %v189, %v188
    %v191 = vrot.slane %v171, 2
    %v192 = vsel %vm155, %v191, %v190
    %v193 = vrot.slane %v172, 1
    %v194 = vsel %vm158, %v193, %v192
    %195 = vrot.lane.b32.xlu0 %v194, 37
    %v196 = vpop.permute.xlu0 %195
    %vm198 = vcmask 433448
    %199 = vst.msk [vmem:[#allocation2] sm:$0xff] %vm198, %v196
    %v200 = vld [vmem:[#allocation4 + $0x2] sm:$0x1]
    %v201 = vld [vmem:[#allocation4 + $0x12] sm:$0x1]
    %v202 = vld [vmem:[#allocation4 + $0x22] sm:$0x1]
    %v203 = vld [vmem:[#allocation4 + $0x32] sm:$0x1]
    %v204 = vld [vmem:[#allocation4 + $0x42] sm:$0x1]
    %v205 = vld [vmem:[#allocation4 + $0x52] sm:$0x1]
    %v206 = vld [vmem:[#allocation4 + $0x62] sm:$0x1]
    %v207 = vld [vmem:[#allocation4 + $0x72] sm:$0x1]
    %v216 = vrot.slane %v201, 7
    %v217 = vsel %vm140, %v216, %v200
    %v218 = vrot.slane %v202, 6
    %v219 = vsel %vm143, %v218, %v217
    %v220 = vrot.slane %v203, 5
    %v221 = vsel %vm146, %v220, %v219
    %v222 = vrot.slane %v204, 4
    %v223 = vsel %vm149, %v222, %v221
    %v224 = vrot.slane %v205, 3
    %v225 = vsel %vm152, %v224, %v223
    %v226 = vrot.slane %v206, 2
    %v227 = vsel %vm155, %v226, %v225
    %v228 = vrot.slane %v207, 1
    %v229 = vsel %vm158, %v228, %v227
    %230 = vrot.lane.b32.xlu0 %v229, 55
    %v231 = vpop.permute.xlu0 %230
    %vm233 = vcmask 581048
    %234 = vst.msk [vmem:[#allocation2] sm:$0xff] %vm233, %v231
    %v235 = vld [vmem:[#allocation4 + $0x3] sm:$0x1]
    %v236 = vld [vmem:[#allocation4 + $0x13] sm:$0x1]
    %v237 = vld [vmem:[#allocation4 + $0x23] sm:$0x1]
    %v238 = vld [vmem:[#allocation4 + $0x33] sm:$0x1]
    %v239 = vld [vmem:[#allocation4 + $0x43] sm:$0x1]
    %v240 = vld [vmem:[#allocation4 + $0x53] sm:$0x1]
    %v241 = vld [vmem:[#allocation4 + $0x63] sm:$0x1]
    %v242 = vld [vmem:[#allocation4 + $0x73] sm:$0x1]
    %v251 = vrot.slane %v236, 7
    %v252 = vsel %vm140, %v251, %v235
    %v253 = vrot.slane %v237, 6
    %v254 = vsel %vm143, %v253, %v252
    %v255 = vrot.slane %v238, 5
    %v256 = vsel %vm146, %v255, %v254
    %v257 = vrot.slane %v239, 4
    %v258 = vsel %vm149, %v257, %v256
    %v259 = vrot.slane %v240, 3
    %v260 = vsel %vm152, %v259, %v258
    %v261 = vrot.slane %v241, 2
    %v262 = vsel %vm155, %v261, %v260
    %v263 = vrot.slane %v242, 1
    %v264 = vsel %vm158, %v263, %v262
    %265 = vrot.lane.b32.xlu0 %v264, 73
    %v266 = vpop.permute.xlu0 %265
    %vm268 = vcmask 728648
    %269 = vst.msk [vmem:[#allocation2] sm:$0xff] %vm268, %v266
    %v270 = vld [vmem:[#allocation4 + $0x4] sm:$0x1]
    %v271 = vld [vmem:[#allocation4 + $0x14] sm:$0x1]
    %v272 = vld [vmem:[#allocation4 + $0x24] sm:$0x1]
    %v273 = vld [vmem:[#allocation4 + $0x34] sm:$0x1]
    %v274 = vld [vmem:[#allocation4 + $0x44] sm:$0x1]
    %v275 = vld [vmem:[#allocation4 + $0x54] sm:$0x1]
    %v276 = vld [vmem:[#allocation4 + $0x64] sm:$0x1]
    %v277 = vld [vmem:[#allocation4 + $0x74] sm:$0x1]
    %v286 = vrot.slane %v271, 7
    %v287 = vsel %vm140, %v286, %v270
    %v288 = vrot.slane %v272, 6
    %v289 = vsel %vm143, %v288, %v287
    %v290 = vrot.slane %v273, 5
    %v291 = vsel %vm146, %v290, %v289
    %v292 = vrot.slane %v274, 4
    %v293 = vsel %vm149, %v292, %v291
    %v294 = vrot.slane %v275, 3
    %v295 = vsel %vm152, %v294, %v293
    %v296 = vrot.slane %v276, 2
    %v297 = vsel %vm155, %v296, %v295
    %v298 = vrot.slane %v277, 1
    %v299 = vsel %vm158, %v298, %v297
    %300 = vrot.lane.b32.xlu0 %v299, 91
    %v301 = vpop.permute.xlu0 %300
    %vm303 = vcmask 876248
    %304 = vst.msk [vmem:[#allocation2] sm:$0xff] %vm303, %v301
    %v305 = vld [vmem:[#allocation4 + $0x5] sm:$0x1]
    %v306 = vld [vmem:[#allocation4 + $0x15] sm:$0x1]
    %v307 = vld [vmem:[#allocation4 + $0x25] sm:$0x1]
    %v308 = vld [vmem:[#allocation4 + $0x35] sm:$0x1]
    %v309 = vld [vmem:[#allocation4 + $0x45] sm:$0x1]
    %v310 = vld [vmem:[#allocation4 + $0x55] sm:$0x1]
    %v311 = vld [vmem:[#allocation4 + $0x65] sm:$0x1]
    %v312 = vld [vmem:[#allocation4 + $0x75] sm:$0x1]
    %v321 = vrot.slane %v306, 7
    %v322 = vsel %vm140, %v321, %v305
    %v323 = vrot.slane %v307, 6
    %v324 = vsel %vm143, %v323, %v322
    %v325 = vrot.slane %v308, 5
    %v326 = vsel %vm146, %v325, %v324
    %v327 = vrot.slane %v309, 4
    %v328 = vsel %vm149, %v327, %v326
    %v329 = vrot.slane %v310, 3
    %v330 = vsel %vm152, %v329, %v328
    %v331 = vrot.slane %v311, 2
    %v332 = vsel %vm155, %v331, %v330
    %v333 = vrot.slane %v312, 1
    %v334 = vsel %vm158, %v333, %v332
    %335 = vrot.lane.b32.xlu0 %v334, 109
    %v336 = vpop.permute.xlu0 %335
    %vm338 = vcmask 1023848
    %339 = vst.msk [vmem:[#allocation2] sm:$0xff] %vm338, %v336
    %v340 = vld [vmem:[#allocation4 + $0x6] sm:$0x1]
    %v341 = vld [vmem:[#allocation4 + $0x16] sm:$0x1]
    %v342 = vld [vmem:[#allocation4 + $0x26] sm:$0x1]
    %v343 = vld [vmem:[#allocation4 + $0x36] sm:$0x1]
    %v344 = vld [vmem:[#allocation4 + $0x46] sm:$0x1]
    %v345 = vld [vmem:[#allocation4 + $0x56] sm:$0x1]
    %v346 = vld [vmem:[#allocation4 + $0x66] sm:$0x1]
    %v347 = vld [vmem:[#allocation4 + $0x76] sm:$0x1]
    %v356 = vrot.slane %v341, 7
    %v357 = vsel %vm140, %v356, %v340
    %v358 = vrot.slane %v342, 6
    %v359 = vsel %vm143, %v358, %v357
    %v360 = vrot.slane %v343, 5
    %v361 = vsel %vm146, %v360, %v359
    %v362 = vrot.slane %v344, 4
    %v363 = vsel %vm149, %v362, %v361
    %v364 = vrot.slane %v345, 3
    %v365 = vsel %vm152, %v364, %v363
    %v366 = vrot.slane %v346, 2
    %v367 = vsel %vm155, %v366, %v365
    %v368 = vrot.slane %v347, 1
    %v369 = vsel %vm158, %v368, %v367
    %370 = vrot.lane.b32.xlu0 %v369, 127
    %v371 = vpop.permute.xlu0 %370
    %vm373 = vcmask 1048568
    %374 = vst.msk [vmem:[#allocation2] sm:$0xff] %vm373, %v371
    %vm375 = vcmask 121856
    %376 = vst.msk [vmem:[#allocation2 + $0x8] sm:$0xff] %vm375, %v371
    %v377 = vld [vmem:[#allocation4 + $0x7] sm:$0x1]
    %v378 = vld [vmem:[#allocation4 + $0x17] sm:$0x1]
    %v379 = vld [vmem:[#allocation4 + $0x27] sm:$0x1]
    %v380 = vld [vmem:[#allocation4 + $0x37] sm:$0x1]
    %v381 = vld [vmem:[#allocation4 + $0x47] sm:$0x1]
    %v382 = vld [vmem:[#allocation4 + $0x57] sm:$0x1]
    %v383 = vld [vmem:[#allocation4 + $0x67] sm:$0x1]
    %v384 = vld [vmem:[#allocation4 + $0x77] sm:$0x1]
    %v393 = vrot.slane %v378, 7
    %v394 = vsel %vm140, %v393, %v377
    %v395 = vrot.slane %v379, 6
    %v396 = vsel %vm143, %v395, %v394
    %v397 = vrot.slane %v380, 5
    %v398 = vsel %vm146, %v397, %v396
    %v399 = vrot.slane %v381, 4
    %v400 = vsel %vm149, %v399, %v398
    %v401 = vrot.slane %v382, 3
    %v402 = vsel %vm152, %v401, %v400
    %v403 = vrot.slane %v383, 2
    %v404 = vsel %vm155, %v403, %v402
    %v405 = vrot.slane %v384, 1
    %v406 = vsel %vm158, %v405, %v404
    %407 = vrot.lane.b32.xlu0 %v406, 17
    %v408 = vpop.permute.xlu0 %407
    %vm410 = vcmask 269448
    %411 = vst.msk [vmem:[#allocation2 + $0x8] sm:$0xff] %vm410, %v408
    %v412 = vld [vmem:[#allocation4 + $0x8] sm:$0x1]
    %v413 = vld [vmem:[#allocation4 + $0x18] sm:$0x1]
    %v414 = vld [vmem:[#allocation4 + $0x28] sm:$0x1]
    %v415 = vld [vmem:[#allocation4 + $0x38] sm:$0x1]
    %v416 = vld [vmem:[#allocation4 + $0x48] sm:$0x1]
    %v417 = vld [vmem:[#allocation4 + $0x58] sm:$0x1]
    %v418 = vld [vmem:[#allocation4 + $0x68] sm:$0x1]
    %v419 = vld [vmem:[#allocation4 + $0x78] sm:$0x1]
    %v428 = vrot.slane %v413, 7
    %v429 = vsel %vm140, %v428, %v412
    %v430 = vrot.slane %v414, 6
    %v431 = vsel %vm143, %v430, %v429
    %v432 = vrot.slane %v415, 5
    %v433 = vsel %vm146, %v432, %v431
    %v434 = vrot.slane %v416, 4
    %v435 = vsel %vm149, %v434, %v433
    %v436 = vrot.slane %v417, 3
    %v437 = vsel %vm152, %v436, %v435
    %v438 = vrot.slane %v418, 2
    %v439 = vsel %vm155, %v438, %v437
    %v440 = vrot.slane %v419, 1
    %v441 = vsel %vm158, %v440, %v439
    %442 = vrot.lane.b32.xlu0 %v441, 35
    %v443 = vpop.permute.xlu0 %442
    %vm445 = vcmask 417048
    %446 = vst.msk [vmem:[#allocation2 + $0x8] sm:$0xff] %vm445, %v443
    %v447 = vld [vmem:[#allocation4 + $0x9] sm:$0x1]
    %v448 = vld [vmem:[#allocation4 + $0x19] sm:$0x1]
    %v449 = vld [vmem:[#allocation4 + $0x29] sm:$0x1]
    %v450 = vld [vmem:[#allocation4 + $0x39] sm:$0x1]
    %v451 = vld [vmem:[#allocation4 + $0x49] sm:$0x1]
    %v452 = vld [vmem:[#allocation4 + $0x59] sm:$0x1]
    %v453 = vld [vmem:[#allocation4 + $0x69] sm:$0x1]
    %v454 = vld [vmem:[#allocation4 + $0x79] sm:$0x1]
    %v463 = vrot.slane %v448, 7
    %v464 = vsel %vm140, %v463, %v447
    %v465 = vrot.slane %v449, 6
    %v466 = vsel %vm143, %v465, %v464
    %v467 = vrot.slane %v450, 5
    %v468 = vsel %vm146, %v467, %v466
    %v469 = vrot.slane %v451, 4
    %v470 = vsel %vm149, %v469, %v468
    %v471 = vrot.slane %v452, 3
    %v472 = vsel %vm152, %v471, %v470
    %v473 = vrot.slane %v453, 2
    %v474 = vsel %vm155, %v473, %v472
    %v475 = vrot.slane %v454, 1
    %v476 = vsel %vm158, %v475, %v474
    %477 = vrot.lane.b32.xlu0 %v476, 53
    %v478 = vpop.permute.xlu0 %477
    %vm480 = vcmask 564648
    %481 = vst.msk [vmem:[#allocation2 + $0x8] sm:$0xff] %vm480, %v478
    %v482 = vld [vmem:[#allocation4 + $0xa] sm:$0x1]
    %v483 = vld [vmem:[#allocation4 + $0x1a] sm:$0x1]
    %v484 = vld [vmem:[#allocation4 + $0x2a] sm:$0x1]
    %v485 = vld [vmem:[#allocation4 + $0x3a] sm:$0x1]
    %v486 = vld [vmem:[#allocation4 + $0x4a] sm:$0x1]
    %v487 = vld [vmem:[#allocation4 + $0x5a] sm:$0x1]
    %v488 = vld [vmem:[#allocation4 + $0x6a] sm:$0x1]
    %v489 = vld [vmem:[#allocation4 + $0x7a] sm:$0x1]
    %v498 = vrot.slane %v483, 7
    %v499 = vsel %vm140, %v498, %v482
    %v500 = vrot.slane %v484, 6
    %v501 = vsel %vm143, %v500, %v499
    %v502 = vrot.slane %v485, 5
    %v503 = vsel %vm146, %v502, %v501
    %v504 = vrot.slane %v486, 4
    %v505 = vsel %vm149, %v504, %v503
    %v506 = vrot.slane %v487, 3
    %v507 = vsel %vm152, %v506, %v505
    %v508 = vrot.slane %v488, 2
    %v509 = vsel %vm155, %v508, %v507
    %v510 = vrot.slane %v489, 1
    %v511 = vsel %vm158, %v510, %v509
    %512 = vrot.lane.b32.xlu0 %v511, 71
    %v513 = vpop.permute.xlu0 %512
    %vm515 = vcmask 712248
    %516 = vst.msk [vmem:[#allocation2 + $0x8] sm:$0xff] %vm515, %v513
    %v517 = vld [vmem:[#allocation4 + $0xb] sm:$0x1]
    %v518 = vld [vmem:[#allocation4 + $0x1b] sm:$0x1]
    %v519 = vld [vmem:[#allocation4 + $0x2b] sm:$0x1]
    %v520 = vld [vmem:[#allocation4 + $0x3b] sm:$0x1]
    %v521 = vld [vmem:[#allocation4 + $0x4b] sm:$0x1]
    %v522 = vld [vmem:[#allocation4 + $0x5b] sm:$0x1]
    %v523 = vld [vmem:[#allocation4 + $0x6b] sm:$0x1]
    %v524 = vld [vmem:[#allocation4 + $0x7b] sm:$0x1]
    %v533 = vrot.slane %v518, 7
    %v534 = vsel %vm140, %v533, %v517
    %v535 = vrot.slane %v519, 6
    %v536 = vsel %vm143, %v535, %v534
    %v537 = vrot.slane %v520, 5
    %v538 = vsel %vm146, %v537, %v536
    %v539 = vrot.slane %v521, 4
    %v540 = vsel %vm149, %v539, %v538
    %v541 = vrot.slane %v522, 3
    %v542 = vsel %vm152, %v541, %v540
    %v543 = vrot.slane %v523, 2
    %v544 = vsel %vm155, %v543, %v542
    %v545 = vrot.slane %v524, 1
    %v546 = vsel %vm158, %v545, %v544
    %547 = vrot.lane.b32.xlu0 %v546, 89
    %v548 = vpop.permute.xlu0 %547
    %vm550 = vcmask 859848
    %551 = vst.msk [vmem:[#allocation2 + $0x8] sm:$0xff] %vm550, %v548
    %v552 = vld [vmem:[#allocation4 + $0xc] sm:$0x1]
    %v553 = vld [vmem:[#allocation4 + $0x1c] sm:$0x1]
    %v554 = vld [vmem:[#allocation4 + $0x2c] sm:$0x1]
    %v555 = vld [vmem:[#allocation4 + $0x3c] sm:$0x1]
    %v556 = vld [vmem:[#allocation4 + $0x4c] sm:$0x1]
    %v557 = vld [vmem:[#allocation4 + $0x5c] sm:$0x1]
    %v558 = vld [vmem:[#allocation4 + $0x6c] sm:$0x1]
    %v559 = vld [vmem:[#allocation4 + $0x7c] sm:$0x1]
    %v568 = vrot.slane %v553, 7
    %v569 = vsel %vm140, %v568, %v552
    %v570 = vrot.slane %v554, 6
    %v571 = vsel %vm143, %v570, %v569
    %v572 = vrot.slane %v555, 5
    %v573 = vsel %vm146, %v572, %v571
    %v574 = vrot.slane %v556, 4
    %v575 = vsel %vm149, %v574, %v573
    %v576 = vrot.slane %v557, 3
    %v577 = vsel %vm152, %v576, %v575
    %v578 = vrot.slane %v558, 2
    %v579 = vsel %vm155, %v578, %v577
    %v580 = vrot.slane %v559, 1
    %v581 = vsel %vm158, %v580, %v579
    %582 = vrot.lane.b32.xlu0 %v581, 107
    %v583 = vpop.permute.xlu0 %582
    %vm585 = vcmask 1007448
    %586 = vst.msk [vmem:[#allocation2 + $0x8] sm:$0xff] %vm585, %v583
    %v587 = vld [vmem:[#allocation4 + $0xd] sm:$0x1]
    %v588 = vld [vmem:[#allocation4 + $0x1d] sm:$0x1]
    %v589 = vld [vmem:[#allocation4 + $0x2d] sm:$0x1]
    %v590 = vld [vmem:[#allocation4 + $0x3d] sm:$0x1]
    %v591 = vld [vmem:[#allocation4 + $0x4d] sm:$0x1]
    %v592 = vld [vmem:[#allocation4 + $0x5d] sm:$0x1]
    %v593 = vld [vmem:[#allocation4 + $0x6d] sm:$0x1]
    %v594 = vld [vmem:[#allocation4 + $0x7d] sm:$0x1]
    %v603 = vrot.slane %v588, 7
    %v604 = vsel %vm140, %v603, %v587
    %v605 = vrot.slane %v589, 6
    %v606 = vsel %vm143, %v605, %v604
    %v607 = vrot.slane %v590, 5
    %v608 = vsel %vm146, %v607, %v606
    %v609 = vrot.slane %v591, 4
    %v610 = vsel %vm149, %v609, %v608
    %v611 = vrot.slane %v592, 3
    %v612 = vsel %vm152, %v611, %v610
    %v613 = vrot.slane %v593, 2
    %v614 = vsel %vm155, %v613, %v612
    %v615 = vrot.slane %v594, 1
    %v616 = vsel %vm158, %v615, %v614
    %617 = vrot.lane.b32.xlu0 %v616, 125
    %v618 = vpop.permute.xlu0 %617
    %vm620 = vcmask 1048552
    %621 = vst.msk [vmem:[#allocation2 + $0x8] sm:$0xff] %vm620, %v618
    %vm622 = vcmask 105472
    %623 = vst.msk [vmem:[#allocation2 + $0x10] sm:$0xff] %vm622, %v618
    %v624 = vld [vmem:[#allocation4 + $0xe] sm:$0x1]
    %v625 = vld [vmem:[#allocation4 + $0x1e] sm:$0x1]
    %v626 = vld [vmem:[#allocation4 + $0x2e] sm:$0x1]
    %v627 = vld [vmem:[#allocation4 + $0x3e] sm:$0x1]
    %v628 = vld [vmem:[#allocation4 + $0x4e] sm:$0x1]
    %v629 = vld [vmem:[#allocation4 + $0x5e] sm:$0x1]
    %v630 = vld [vmem:[#allocation4 + $0x6e] sm:$0x1]
    %v631 = vld [vmem:[#allocation4 + $0x7e] sm:$0x1]
    %v640 = vrot.slane %v625, 7
    %v641 = vsel %vm140, %v640, %v624
    %v642 = vrot.slane %v626, 6
    %v643 = vsel %vm143, %v642, %v641
    %v644 = vrot.slane %v627, 5
    %v645 = vsel %vm146, %v644, %v643
    %v646 = vrot.slane %v628, 4
    %v647 = vsel %vm149, %v646, %v645
    %v648 = vrot.slane %v629, 3
    %v649 = vsel %vm152, %v648, %v647
    %v650 = vrot.slane %v630, 2
    %v651 = vsel %vm155, %v650, %v649
    %v652 = vrot.slane %v631, 1
    %v653 = vsel %vm158, %v652, %v651
    %654 = vrot.lane.b32.xlu0 %v653, 15
    %v655 = vpop.permute.xlu0 %654
    %vm657 = vcmask 253048
    %658 = vst.msk [vmem:[#allocation2 + $0x10] sm:$0xff] %vm657, %v655
    %v659 = vld [vmem:[#allocation4 + $0xf] sm:$0x1]
    %v660 = vld [vmem:[#allocation4 + $0x1f] sm:$0x1]
    %v661 = vld [vmem:[#allocation4 + $0x2f] sm:$0x1]
    %v662 = vld [vmem:[#allocation4 + $0x3f] sm:$0x1]
    %v663 = vld [vmem:[#allocation4 + $0x4f] sm:$0x1]
    %v664 = vld [vmem:[#allocation4 + $0x5f] sm:$0x1]
    %v665 = vld [vmem:[#allocation4 + $0x6f] sm:$0x1]
    %v666 = vld [vmem:[#allocation4 + $0x7f] sm:$0x1]
    %v675 = vrot.slane %v660, 7
    %v676 = vsel %vm140, %v675, %v659
    %v677 = vrot.slane %v661, 6
    %v678 = vsel %vm143, %v677, %v676
    %v679 = vrot.slane %v662, 5
    %v680 = vsel %vm146, %v679, %v678
    %v681 = vrot.slane %v663, 4
    %v682 = vsel %vm149, %v681, %v680
    %v683 = vrot.slane %v664, 3
    %v684 = vsel %vm152, %v683, %v682
    %v685 = vrot.slane %v665, 2
    %v686 = vsel %vm155, %v685, %v684
    %v687 = vrot.slane %v666, 1
    %v688 = vsel %vm158, %v687, %v686
    %689 = vrot.lane.b32.xlu0 %v688, 33
    %v690 = vpop.permute.xlu0 %689
    %vm692 = vcmask 400648
    %693 = vst.msk [vmem:[#allocation2 + $0x10] sm:$0xff] %vm692, %v690
    %v694 = vld [vmem:[#allocation2] sm:$0xff]
    %v695 = vld [vmem:[#allocation2 + $0x8] sm:$0xff]
    %v696 = vld [vmem:[#allocation2 + $0x10] sm:$0xff]
    %697 = vst [vmem:[#allocation3] sm:$0xff] %v694
    %698 = vst [vmem:[#allocation3 + $0x8] sm:$0xff] %v695
    %vm699 = vcmask 261120
    %700 = vst.msk [vmem:[#allocation3 + $0x10] sm:$0xff] %vm699, %v696
    %v701 = vld [vmem:[#allocation2] sm:$0xff]
    %v702 = vld [vmem:[#allocation2 + $0x8] sm:$0xff]
    %v703 = vld [vmem:[#allocation2 + $0x10] sm:$0xff]
    %707 = vrot.lane.b32.xlu0 %v701, 127
    %v708 = vpop.permute.xlu0 %707
    %709 = vrot.lane.b32.xlu0 %v702, 127
    %v710 = vpop.permute.xlu0 %709
    %711 = vrot.lane.b32.xlu0 %v703, 127
    %v712 = vpop.permute.xlu0 %711
    %vm713 = vcmask 1039360
    %v714 = vsel %vm713, %v708, %v710
    %v715 = vsel %vm713, %v710, %v712
    %719 = vst [vmem:[#allocation3 + $0x18] sm:$0xff] %v714
    %720 = vst [vmem:[#allocation3 + $0x20] sm:$0xff] %v715
    %721 = vst.msk [vmem:[#allocation3 + $0x28] sm:$0xff] %vm699, %v712
    %v722 = vld [vmem:[#allocation2] sm:$0xff]
    %v723 = vld [vmem:[#allocation2 + $0x8] sm:$0xff]
    %v724 = vld [vmem:[#allocation2 + $0x10] sm:$0xff]
    %728 = vrot.lane.b32.xlu0 %v722, 126
    %v729 = vpop.permute.xlu0 %728
    %730 = vrot.lane.b32.xlu0 %v723, 126
    %v731 = vpop.permute.xlu0 %730
    %732 = vrot.lane.b32.xlu0 %v724, 126
    %v733 = vpop.permute.xlu0 %732
    %vm734 = vcmask 1031168
    %v735 = vsel %vm734, %v729, %v731
    %v736 = vsel %vm734, %v731, %v733
    %740 = vst [vmem:[#allocation3 + $0x30] sm:$0xff] %v735
    %741 = vst [vmem:[#allocation3 + $0x38] sm:$0xff] %v736
    %742 = vst.msk [vmem:[#allocation3 + $0x40] sm:$0xff] %vm699, %v733
    %v743 = vld [vmem:[#allocation2] sm:$0xff]
    %v744 = vld [vmem:[#allocation2 + $0x8] sm:$0xff]
    %v745 = vld [vmem:[#allocation2 + $0x10] sm:$0xff]
    %749 = vrot.lane.b32.xlu0 %v743, 110
    %v750 = vpop.permute.xlu0 %749
    %751 = vrot.lane.b32.xlu0 %v744, 110
    %v752 = vpop.permute.xlu0 %751
    %753 = vrot.lane.b32.xlu0 %v745, 110
    %v754 = vpop.permute.xlu0 %753
    %vm755 = vcmask 900096
    %v756 = vsel %vm755, %v750, %v752
    %v757 = vsel %vm755, %v752, %v754
    %761 = vst [vmem:[#allocation3 + $0x48] sm:$0xff] %v756
    %762 = vst [vmem:[#allocation3 + $0x50] sm:$0xff] %v757
    %763 = vst.msk [vmem:[#allocation3 + $0x58] sm:$0xff] %vm699, %v754
    %v764 = vld [vmem:[#allocation2] sm:$0xff]
    %v765 = vld [vmem:[#allocation2 + $0x8] sm:$0xff]
    %v766 = vld [vmem:[#allocation2 + $0x10] sm:$0xff]
    %770 = vrot.lane.b32.xlu0 %v764, 109
    %v771 = vpop.permute.xlu0 %770
    %772 = vrot.lane.b32.xlu0 %v765, 109
    %v773 = vpop.permute.xlu0 %772
    %774 = vrot.lane.b32.xlu0 %v766, 109
    %v775 = vpop.permute.xlu0 %774
    %vm776 = vcmask 891904
    %v777 = vsel %vm776, %v771, %v773
    %v778 = vsel %vm776, %v773, %v775
    %782 = vst [vmem:[#allocation3 + $0x60] sm:$0xff] %v777
    %783 = vst [vmem:[#allocation3 + $0x68] sm:$0xff] %v778
    %784 = vst.msk [vmem:[#allocation3 + $0x70] sm:$0xff] %vm699, %v775
    %v785 = vld [vmem:[#allocation2] sm:$0xff]
    %v786 = vld [vmem:[#allocation2 + $0x8] sm:$0xff]
    %v787 = vld [vmem:[#allocation2 + $0x10] sm:$0xff]
    %791 = vrot.lane.b32.xlu0 %v785, 108
    %v792 = vpop.permute.xlu0 %791
    %793 = vrot.lane.b32.xlu0 %v786, 108
    %v794 = vpop.permute.xlu0 %793
    %795 = vrot.lane.b32.xlu0 %v787, 108
    %v796 = vpop.permute.xlu0 %795
    %vm797 = vcmask 883712
    %v798 = vsel %vm797, %v792, %v794
    %v799 = vsel %vm797, %v794, %v796
    %803 = vst [vmem:[#allocation3 + $0x78] sm:$0xff] %v798
    %804 = vst [vmem:[#allocation3 + $0x80] sm:$0xff] %v799
    %805 = vst.msk [vmem:[#allocation3 + $0x88] sm:$0xff] %vm699, %v796
    %v806 = vld [vmem:[#allocation2] sm:$0xff]
    %v807 = vld [vmem:[#allocation2 + $0x8] sm:$0xff]
    %v808 = vld [vmem:[#allocation2 + $0x10] sm:$0xff]
    %812 = vrot.lane.b32.xlu0 %v806, 92
    %v813 = vpop.permute.xlu0 %812
    %814 = vrot.lane.b32.xlu0 %v807, 92
    %v815 = vpop.permute.xlu0 %814
    %816 = vrot.lane.b32.xlu0 %v808, 92
    %v817 = vpop.permute.xlu0 %816
    %vm818 = vcmask 752640
    %v819 = vsel %vm818, %v813, %v815
    %v820 = vsel %vm818, %v815, %v817
    %824 = vst [vmem:[#allocation3 + $0x90] sm:$0xff] %v819
    %825 = vst [vmem:[#allocation3 + $0x98] sm:$0xff] %v820
    %826 = vst.msk [vmem:[#allocation3 + $0xa0] sm:$0xff] %vm699, %v817
    %v827 = vld [vmem:[#allocation2] sm:$0xff]
    %v828 = vld [vmem:[#allocation2 + $0x8] sm:$0xff]
    %v829 = vld [vmem:[#allocation2 + $0x10] sm:$0xff]
    %833 = vrot.lane.b32.xlu0 %v827, 91
    %v834 = vpop.permute.xlu0 %833
    %835 = vrot.lane.b32.xlu0 %v828, 91
    %v836 = vpop.permute.xlu0 %835
    %837 = vrot.lane.b32.xlu0 %v829, 91
    %v838 = vpop.permute.xlu0 %837
    %vm839 = vcmask 744448
    %v840 = vsel %vm839, %v834, %v836
    %v841 = vsel %vm839, %v836, %v838
    %845 = vst [vmem:[#allocation3 + $0xa8] sm:$0xff] %v840
    %846 = vst [vmem:[#allocation3 + $0xb0] sm:$0xff] %v841
    %847 = vst.msk [vmem:[#allocation3 + $0xb8] sm:$0xff] %vm699, %v838
    %v848 = vld [vmem:[#allocation2] sm:$0xff]
    %v849 = vld [vmem:[#allocation2 + $0x8] sm:$0xff]
    %v850 = vld [vmem:[#allocation2 + $0x10] sm:$0xff]
    %854 = vrot.lane.b32.xlu0 %v848, 90
    %v855 = vpop.permute.xlu0 %854
    %856 = vrot.lane.b32.xlu0 %v849, 90
    %v857 = vpop.permute.xlu0 %856
    %858 = vrot.lane.b32.xlu0 %v850, 90
    %v859 = vpop.permute.xlu0 %858
    %vm860 = vcmask 736256
    %v861 = vsel %vm860, %v855, %v857
    %v862 = vsel %vm860, %v857, %v859
    %866 = vst [vmem:[#allocation3 + $0xc0] sm:$0xff] %v861
    %867 = vst [vmem:[#allocation3 + $0xc8] sm:$0xff] %v862
    %868 = vst.msk [vmem:[#allocation3 + $0xd0] sm:$0xff] %vm699, %v859
    %v869 = vld [vmem:[#allocation3] sm:$0xff]
    %v870 = vld [vmem:[#allocation3 + $0x8] sm:$0xff]
    %v871 = vld [vmem:[#allocation3 + $0x10] sm:$0xff]
    %v872 = vld [vmem:[#allocation3 + $0x18] sm:$0xff]
    %v873 = vld [vmem:[#allocation3 + $0x20] sm:$0xff]
    %v874 = vld [vmem:[#allocation3 + $0x28] sm:$0xff]
    %v875 = vld [vmem:[#allocation3 + $0x30] sm:$0xff]
    %v876 = vld [vmem:[#allocation3 + $0x38] sm:$0xff]
    %v877 = vld [vmem:[#allocation3 + $0x40] sm:$0xff]
    %v878 = vld [vmem:[#allocation3 + $0x48] sm:$0xff]
    %v879 = vld [vmem:[#allocation3 + $0x50] sm:$0xff]
    %v880 = vld [vmem:[#allocation3 + $0x58] sm:$0xff]
    %v881 = vld [vmem:[#allocation3 + $0x60] sm:$0xff]
    %v882 = vld [vmem:[#allocation3 + $0x68] sm:$0xff]
    %v883 = vld [vmem:[#allocation3 + $0x70] sm:$0xff]
    %v884 = vld [vmem:[#allocation3 + $0x78] sm:$0xff]
    %v885 = vld [vmem:[#allocation3 + $0x80] sm:$0xff]
    %v886 = vld [vmem:[#allocation3 + $0x88] sm:$0xff]
    %v887 = vld [vmem:[#allocation3 + $0x90] sm:$0xff]
    %v888 = vld [vmem:[#allocation3 + $0x98] sm:$0xff]
    %v889 = vld [vmem:[#allocation3 + $0xa0] sm:$0xff]
    %v890 = vld [vmem:[#allocation3 + $0xa8] sm:$0xff]
    %v891 = vld [vmem:[#allocation3 + $0xb0] sm:$0xff]
    %v892 = vld [vmem:[#allocation3 + $0xb8] sm:$0xff]
    %v893 = vld [vmem:[#allocation3 + $0xc0] sm:$0xff]
    %v894 = vld [vmem:[#allocation3 + $0xc8] sm:$0xff]
    %v895 = vld [vmem:[#allocation3 + $0xd0] sm:$0xff]
    %vm896 = vcmask 588800
    %v898 = vsel %vm896, %v50, 0
    %900 = vmatpush.msra.mxu0 0.0
    %901 = vmatpush.msra.mxu0 0.0
    %902 = vmatpush.msra.mxu0 0.0
    %903 = vmatpush.msra.mxu0 0.0
    %904 = vmatpush.msra.mxu0 0.0
    %905 = vmatpush.msra.mxu0 0.0
    %906 = vmatpush.msra.mxu0 0.0
    %907 = vmatpush.msra.mxu0 %v893
    %908 = vmatpush.msra.mxu0 %v890
    %909 = vmatpush.msra.mxu0 %v887
    %910 = vmatpush.msra.mxu0 %v884
    %911 = vmatpush.msra.mxu0 %v881
    %912 = vmatpush.msra.mxu0 %v878
    %913 = vmatpush.msra.mxu0 %v875
    %914 = vmatpush.msra.mxu0 %v872
    %915 = vmatpush.msra.mxu0 %v869
    %916 = vmatmul.f32.gmra.mxu0 %v898
    %v917 = vpop.f32.mrf.mxu0
    %v918 = vadd.f32 0.0, %v917
    %919 = vdwg.mxu0
    %920 = vmatpush.msra.mxu0 0.0
    %921 = vmatpush.msra.mxu0 0.0
    %922 = vmatpush.msra.mxu0 0.0
    %923 = vmatpush.msra.mxu0 0.0
    %924 = vmatpush.msra.mxu0 0.0
    %925 = vmatpush.msra.mxu0 0.0
    %926 = vmatpush.msra.mxu0 0.0
    %927 = vmatpush.msra.mxu0 %v894
    %928 = vmatpush.msra.mxu0 %v891
    %929 = vmatpush.msra.mxu0 %v888
    %930 = vmatpush.msra.mxu0 %v885
    %931 = vmatpush.msra.mxu0 %v882
    %932 = vmatpush.msra.mxu0 %v879
    %933 = vmatpush.msra.mxu0 %v876
    %934 = vmatpush.msra.mxu0 %v873
    %935 = vmatpush.msra.mxu0 %v870
    %936 = vmatmul.f32.gmra.mxu0 %v898
    %v937 = vpop.f32.mrf.mxu0
    %v938 = vadd.f32 0.0, %v937
    %939 = vdwg.mxu0
    %940 = vmatpush.msra.mxu0 0.0
    %941 = vmatpush.msra.mxu0 0.0
    %942 = vmatpush.msra.mxu0 0.0
    %943 = vmatpush.msra.mxu0 0.0
    %944 = vmatpush.msra.mxu0 0.0
    %945 = vmatpush.msra.mxu0 0.0
    %946 = vmatpush.msra.mxu0 0.0
    %947 = vmatpush.msra.mxu0 %v895
    %948 = vmatpush.msra.mxu0 %v892
    %949 = vmatpush.msra.mxu0 %v889
    %950 = vmatpush.msra.mxu0 %v886
    %951 = vmatpush.msra.mxu0 %v883
    %952 = vmatpush.msra.mxu0 %v880
    %953 = vmatpush.msra.mxu0 %v877
    %954 = vmatpush.msra.mxu0 %v874
    %955 = vmatpush.msra.mxu0 %v871
    %956 = vmatmul.f32.gmra.mxu0 %v898
    %v957 = vpop.f32.mrf.mxu0
    %v958 = vadd.f32 0.0, %v957
    %959 = vdwg.mxu0
    %v961 = vsel %vm699, %v958, 0
    %963 = vmatpush.msra.mxu0 %v81
    %964 = vmatpush.msra.mxu0 %v79
    %965 = vmatpush.msra.mxu0 %v77
    %966 = vmatpush.msra.mxu0 %v75
    %967 = vmatpush.msra.mxu0 %v73
    %968 = vmatpush.msra.mxu0 %v71
    %969 = vmatpush.msra.mxu0 %v69
    %970 = vmatpush.msra.mxu0 %v67
    %971 = vmatpush.msra.mxu0 %v65
    %972 = vmatpush.msra.mxu0 %v63
    %973 = vmatpush.msra.mxu0 %v61
    %974 = vmatpush.msra.mxu0 %v59
    %975 = vmatpush.msra.mxu0 %v57
    %976 = vmatpush.msra.mxu0 %v55
    %977 = vmatpush.msra.mxu0 %v53
    %978 = vmatpush.msra.mxu0 %v51
    %979 = vmatmul.f32.gmra.mxu0 %v918
    %v980 = vpop.f32.mrf.mxu0
    %v981 = vadd.f32 0.0, %v980
    %982 = vdwg.mxu0
    %983 = vmatpush.msra.mxu0 %v113
    %984 = vmatpush.msra.mxu0 %v111
    %985 = vmatpush.msra.mxu0 %v109
    %986 = vmatpush.msra.mxu0 %v107
    %987 = vmatpush.msra.mxu0 %v105
    %988 = vmatpush.msra.mxu0 %v103
    %989 = vmatpush.msra.mxu0 %v101
    %990 = vmatpush.msra.mxu0 %v99
    %991 = vmatpush.msra.mxu0 %v97
    %992 = vmatpush.msra.mxu0 %v95
    %993 = vmatpush.msra.mxu0 %v93
    %994 = vmatpush.msra.mxu0 %v91
    %995 = vmatpush.msra.mxu0 %v89
    %996 = vmatpush.msra.mxu0 %v87
    %997 = vmatpush.msra.mxu0 %v85
    %998 = vmatpush.msra.mxu0 %v83
    %999 = vmatmul.f32.gmra.mxu0 %v938
    %v1000 = vpop.f32.mrf.mxu0
    %v1001 = vadd.f32 %v981, %v1000
    %1002 = vdwg.mxu0
    %1003 = vmatpush.msra.mxu0 0.0
    %1004 = vmatpush.msra.mxu0 0.0
    %1005 = vmatpush.msra.mxu0 0.0
    %1006 = vmatpush.msra.mxu0 0.0
    %1007 = vmatpush.msra.mxu0 0.0
    %1008 = vmatpush.msra.mxu0 0.0
    %1009 = vmatpush.msra.mxu0 0.0
    %1010 = vmatpush.msra.mxu0 0.0
    %1011 = vmatpush.msra.mxu0 0.0
    %1012 = vmatpush.msra.mxu0 0.0
    %1013 = vmatpush.msra.mxu0 0.0
    %1014 = vmatpush.msra.mxu0 0.0
    %1015 = vmatpush.msra.mxu0 %v121
    %1016 = vmatpush.msra.mxu0 %v119
    %1017 = vmatpush.msra.mxu0 %v117
    %1018 = vmatpush.msra.mxu0 %v115
    %1019 = vmatmul.f32.gmra.mxu0 %v961
    %v1020 = vpop.f32.mrf.mxu0
    %v1021 = vadd.f32 %v1001, %v1020
    %1022 = vdwg.mxu0
    %1023 = vmatpush.msra.mxu0 %v82
    %1024 = vmatpush.msra.mxu0 %v80
    %1025 = vmatpush.msra.mxu0 %v78
    %1026 = vmatpush.msra.mxu0 %v76
    %1027 = vmatpush.msra.mxu0 %v74
    %1028 = vmatpush.msra.mxu0 %v72
    %1029 = vmatpush.msra.mxu0 %v70
    %1030 = vmatpush.msra.mxu0 %v68
    %1031 = vmatpush.msra.mxu0 %v66
    %1032 = vmatpush.msra.mxu0 %v64
    %1033 = vmatpush.msra.mxu0 %v62
    %1034 = vmatpush.msra.mxu0 %v60
    %1035 = vmatpush.msra.mxu0 %v58
    %1036 = vmatpush.msra.mxu0 %v56
    %1037 = vmatpush.msra.mxu0 %v54
    %1038 = vmatpush.msra.mxu0 %v52
    %1039 = vmatmul.f32.gmra.mxu0 %v918
    %v1040 = vpop.f32.mrf.mxu0
    %v1041 = vadd.f32 0.0, %v1040
    %1042 = vdwg.mxu0
    %1043 = vmatpush.msra.mxu0 %v114
    %1044 = vmatpush.msra.mxu0 %v112
    %1045 = vmatpush.msra.mxu0 %v110
    %1046 = vmatpush.msra.mxu0 %v108
    %1047 = vmatpush.msra.mxu0 %v106
    %1048 = vmatpush.msra.mxu0 %v104
    %1049 = vmatpush.msra.mxu0 %v102
    %1050 = vmatpush.msra.mxu0 %v100
    %1051 = vmatpush.msra.mxu0 %v98
    %1052 = vmatpush.msra.mxu0 %v96
    %1053 = vmatpush.msra.mxu0 %v94
    %1054 = vmatpush.msra.mxu0 %v92
    %1055 = vmatpush.msra.mxu0 %v90
    %1056 = vmatpush.msra.mxu0 %v88
    %1057 = vmatpush.msra.mxu0 %v86
    %1058 = vmatpush.msra.mxu0 %v84
    %1059 = vmatmul.f32.gmra.mxu0 %v938
    %v1060 = vpop.f32.mrf.mxu0
    %v1061 = vadd.f32 %v1041, %v1060
    %1062 = vdwg.mxu0
    %1063 = vmatpush.msra.mxu0 0.0
    %1064 = vmatpush.msra.mxu0 0.0
    %1065 = vmatpush.msra.mxu0 0.0
    %1066 = vmatpush.msra.mxu0 0.0
    %1067 = vmatpush.msra.mxu0 0.0
    %1068 = vmatpush.msra.mxu0 0.0
    %1069 = vmatpush.msra.mxu0 0.0
    %1070 = vmatpush.msra.mxu0 0.0
    %1071 = vmatpush.msra.mxu0 0.0
    %1072 = vmatpush.msra.mxu0 0.0
    %1073 = vmatpush.msra.mxu0 0.0
    %1074 = vmatpush.msra.mxu0 0.0
    %1075 = vmatpush.msra.mxu0 %v122
    %1076 = vmatpush.msra.mxu0 %v120
    %1077 = vmatpush.msra.mxu0 %v118
    %1078 = vmatpush.msra.mxu0 %v116
    %1079 = vmatmul.f32.gmra.mxu0 %v961
    %v1080 = vpop.f32.mrf.mxu0
    %v1081 = vadd.f32 %v1061, %v1080
    %1082 = vdwg.mxu0
    %v1085 = vrot.slane %v1081, 4
    %vm1086 = vcmask 1043456
    %v1087 = vsel %vm1086, %v1021, %v1085
    %1089 = vst [vmem:[%s3] sm:$0xff] %v1087
    %s1090 = scalar_lea.vmem [#allocation4], 128
    %v1091 = vld [vmem:[%s1090] sm:$0x1]
    %v1092 = vld [vmem:[%s1090 + $0x10] sm:$0x1]
    %v1093 = vld [vmem:[%s1090 + $0x20] sm:$0x1]
    %v1094 = vld [vmem:[%s1090 + $0x30] sm:$0x1]
    %v1095 = vld [vmem:[%s1090 + $0x40] sm:$0x1]
    %v1096 = vld [vmem:[%s1090 + $0x50] sm:$0x1]
    %v1097 = vld [vmem:[%s1090 + $0x60] sm:$0x1]
    %v1098 = vld [vmem:[%s1090 + $0x70] sm:$0x1]
    %v1107 = vrot.slane %v1092, 7
    %v1108 = vsel %vm140, %v1107, %v1091
    %v1109 = vrot.slane %v1093, 6
    %v1110 = vsel %vm143, %v1109, %v1108
    %v1111 = vrot.slane %v1094, 5
    %v1112 = vsel %vm146, %v1111, %v1110
    %v1113 = vrot.slane %v1095, 4
    %v1114 = vsel %vm149, %v1113, %v1112
    %v1115 = vrot.slane %v1096, 3
    %v1116 = vsel %vm152, %v1115, %v1114
    %v1117 = vrot.slane %v1097, 2
    %v1118 = vsel %vm155, %v1117, %v1116
    %v1119 = vrot.slane %v1098, 1
    %v1120 = vsel %vm158, %v1119, %v1118
    %1121 = vrot.lane.b32.xlu0 %v1120, 19
    %v1122 = vpop.permute.xlu0 %1121
    %1124 = vst.msk [vmem:[#allocation2] sm:$0xff] %vm163, %v1122
    %v1125 = vld [vmem:[%s1090 + $0x1] sm:$0x1]
    %v1126 = vld [vmem:[%s1090 + $0x11] sm:$0x1]
    %v1127 = vld [vmem:[%s1090 + $0x21] sm:$0x1]
    %v1128 = vld [vmem:[%s1090 + $0x31] sm:$0x1]
    %v1129 = vld [vmem:[%s1090 + $0x41] sm:$0x1]
    %v1130 = vld [vmem:[%s1090 + $0x51] sm:$0x1]
    %v1131 = vld [vmem:[%s1090 + $0x61] sm:$0x1]
    %v1132 = vld [vmem:[%s1090 + $0x71] sm:$0x1]
    %v1141 = vrot.slane %v1126, 7
    %v1142 = vsel %vm140, %v1141, %v1125
    %v1143 = vrot.slane %v1127, 6
    %v1144 = vsel %vm143, %v1143, %v1142
    %v1145 = vrot.slane %v1128, 5
    %v1146 = vsel %vm146, %v1145, %v1144
    %v1147 = vrot.slane %v1129, 4
    %v1148 = vsel %vm149, %v1147, %v1146
    %v1149 = vrot.slane %v1130, 3
    %v1150 = vsel %vm152, %v1149, %v1148
    %v1151 = vrot.slane %v1131, 2
    %v1152 = vsel %vm155, %v1151, %v1150
    %v1153 = vrot.slane %v1132, 1
    %v1154 = vsel %vm158, %v1153, %v1152
    %1155 = vrot.lane.b32.xlu0 %v1154, 37
    %v1156 = vpop.permute.xlu0 %1155
    %1158 = vst.msk [vmem:[#allocation2] sm:$0xff] %vm198, %v1156
    %v1159 = vld [vmem:[%s1090 + $0x2] sm:$0x1]
    %v1160 = vld [vmem:[%s1090 + $0x12] sm:$0x1]
    %v1161 = vld [vmem:[%s1090 + $0x22] sm:$0x1]
    %v1162 = vld [vmem:[%s1090 + $0x32] sm:$0x1]
    %v1163 = vld [vmem:[%s1090 + $0x42] sm:$0x1]
    %v1164 = vld [vmem:[%s1090 + $0x52] sm:$0x1]
    %v1165 = vld [vmem:[%s1090 + $0x62] sm:$0x1]
    %v1166 = vld [vmem:[%s1090 + $0x72] sm:$0x1]
    %v1175 = vrot.slane %v1160, 7
    %v1176 = vsel %vm140, %v1175, %v1159
    %v1177 = vrot.slane %v1161, 6
    %v1178 = vsel %vm143, %v1177, %v1176
    %v1179 = vrot.slane %v1162, 5
    %v1180 = vsel %vm146, %v1179, %v1178
    %v1181 = vrot.slane %v1163, 4
    %v1182 = vsel %vm149, %v1181, %v1180
    %v1183 = vrot.slane %v1164, 3
    %v1184 = vsel %vm152, %v1183, %v1182
    %v1185 = vrot.slane %v1165, 2
    %v1186 = vsel %vm155, %v1185, %v1184
    %v1187 = vrot.slane %v1166, 1
    %v1188 = vsel %vm158, %v1187, %v1186
    %1189 = vrot.lane.b32.xlu0 %v1188, 55
    %v1190 = vpop.permute.xlu0 %1189
    %1192 = vst.msk [vmem:[#allocation2] sm:$0xff] %vm233, %v1190
    %v1193 = vld [vmem:[%s1090 + $0x3] sm:$0x1]
    %v1194 = vld [vmem:[%s1090 + $0x13] sm:$0x1]
    %v1195 = vld [vmem:[%s1090 + $0x23] sm:$0x1]
    %v1196 = vld [vmem:[%s1090 + $0x33] sm:$0x1]
    %v1197 = vld [vmem:[%s1090 + $0x43] sm:$0x1]
    %v1198 = vld [vmem:[%s1090 + $0x53] sm:$0x1]
    %v1199 = vld [vmem:[%s1090 + $0x63] sm:$0x1]
    %v1200 = vld [vmem:[%s1090 + $0x73] sm:$0x1]
    %v1209 = vrot.slane %v1194, 7
    %v1210 = vsel %vm140, %v1209, %v1193
    %v1211 = vrot.slane %v1195, 6
    %v1212 = vsel %vm143, %v1211, %v1210
    %v1213 = vrot.slane %v1196, 5
    %v1214 = vsel %vm146, %v1213, %v1212
    %v1215 = vrot.slane %v1197, 4
    %v1216 = vsel %vm149, %v1215, %v1214
    %v1217 = vrot.slane %v1198, 3
    %v1218 = vsel %vm152, %v1217, %v1216
    %v1219 = vrot.slane %v1199, 2
    %v1220 = vsel %vm155, %v1219, %v1218
    %v1221 = vrot.slane %v1200, 1
    %v1222 = vsel %vm158, %v1221, %v1220
    %1223 = vrot.lane.b32.xlu0 %v1222, 73
    %v1224 = vpop.permute.xlu0 %1223
    %1226 = vst.msk [vmem:[#allocation2] sm:$0xff] %vm268, %v1224
    %v1227 = vld [vmem:[%s1090 + $0x4] sm:$0x1]
    %v1228 = vld [vmem:[%s1090 + $0x14] sm:$0x1]
    %v1229 = vld [vmem:[%s1090 + $0x24] sm:$0x1]
    %v1230 = vld [vmem:[%s1090 + $0x34] sm:$0x1]
    %v1231 = vld [vmem:[%s1090 + $0x44] sm:$0x1]
    %v1232 = vld [vmem:[%s1090 + $0x54] sm:$0x1]
    %v1233 = vld [vmem:[%s1090 + $0x64] sm:$0x1]
    %v1234 = vld [vmem:[%s1090 + $0x74] sm:$0x1]
    %v1243 = vrot.slane %v1228, 7
    %v1244 = vsel %vm140, %v1243, %v1227
    %v1245 = vrot.slane %v1229, 6
    %v1246 = vsel %vm143, %v1245, %v1244
    %v1247 = vrot.slane %v1230, 5
    %v1248 = vsel %vm146, %v1247, %v1246
    %v1249 = vrot.slane %v1231, 4
    %v1250 = vsel %vm149, %v1249, %v1248
    %v1251 = vrot.slane %v1232, 3
    %v1252 = vsel %vm152, %v1251, %v1250
    %v1253 = vrot.slane %v1233, 2
    %v1254 = vsel %vm155, %v1253, %v1252
    %v1255 = vrot.slane %v1234, 1
    %v1256 = vsel %vm158, %v1255, %v1254
    %1257 = vrot.lane.b32.xlu0 %v1256, 91
    %v1258 = vpop.permute.xlu0 %1257
    %1260 = vst.msk [vmem:[#allocation2] sm:$0xff] %vm303, %v1258
    %v1261 = vld [vmem:[%s1090 + $0x5] sm:$0x1]
    %v1262 = vld [vmem:[%s1090 + $0x15] sm:$0x1]
    %v1263 = vld [vmem:[%s1090 + $0x25] sm:$0x1]
    %v1264 = vld [vmem:[%s1090 + $0x35] sm:$0x1]
    %v1265 = vld [vmem:[%s1090 + $0x45] sm:$0x1]
    %v1266 = vld [vmem:[%s1090 + $0x55] sm:$0x1]
    %v1267 = vld [vmem:[%s1090 + $0x65] sm:$0x1]
    %v1268 = vld [vmem:[%s1090 + $0x75] sm:$0x1]
    %v1277 = vrot.slane %v1262, 7
    %v1278 = vsel %vm140, %v1277, %v1261
    %v1279 = vrot.slane %v1263, 6
    %v1280 = vsel %vm143, %v1279, %v1278
    %v1281 = vrot.slane %v1264, 5
    %v1282 = vsel %vm146, %v1281, %v1280
    %v1283 = vrot.slane %v1265, 4
    %v1284 = vsel %vm149, %v1283, %v1282
    %v1285 = vrot.slane %v1266, 3
    %v1286 = vsel %vm152, %v1285, %v1284
    %v1287 = vrot.slane %v1267, 2
    %v1288 = vsel %vm155, %v1287, %v1286
    %v1289 = vrot.slane %v1268, 1
    %v1290 = vsel %vm158, %v1289, %v1288
    %1291 = vrot.lane.b32.xlu0 %v1290, 109
    %v1292 = vpop.permute.xlu0 %1291
    %1294 = vst.msk [vmem:[#allocation2] sm:$0xff] %vm338, %v1292
    %v1295 = vld [vmem:[%s1090 + $0x6] sm:$0x1]
    %v1296 = vld [vmem:[%s1090 + $0x16] sm:$0x1]
    %v1297 = vld [vmem:[%s1090 + $0x26] sm:$0x1]
    %v1298 = vld [vmem:[%s1090 + $0x36] sm:$0x1]
    %v1299 = vld [vmem:[%s1090 + $0x46] sm:$0x1]
    %v1300 = vld [vmem:[%s1090 + $0x56] sm:$0x1]
    %v1301 = vld [vmem:[%s1090 + $0x66] sm:$0x1]
    %v1302 = vld [vmem:[%s1090 + $0x76] sm:$0x1]
    %v1311 = vrot.slane %v1296, 7
    %v1312 = vsel %vm140, %v1311, %v1295
    %v1313 = vrot.slane %v1297, 6
    %v1314 = vsel %vm143, %v1313, %v1312
    %v1315 = vrot.slane %v1298, 5
    %v1316 = vsel %vm146, %v1315, %v1314
    %v1317 = vrot.slane %v1299, 4
    %v1318 = vsel %vm149, %v1317, %v1316
    %v1319 = vrot.slane %v1300, 3
    %v1320 = vsel %vm152, %v1319, %v1318
    %v1321 = vrot.slane %v1301, 2
    %v1322 = vsel %vm155, %v1321, %v1320
    %v1323 = vrot.slane %v1302, 1
    %v1324 = vsel %vm158, %v1323, %v1322
    %1325 = vrot.lane.b32.xlu0 %v1324, 127
    %v1326 = vpop.permute.xlu0 %1325
    %1328 = vst.msk [vmem:[#allocation2] sm:$0xff] %vm373, %v1326
    %1329 = vst.msk [vmem:[#allocation2 + $0x8] sm:$0xff] %vm375, %v1326
    %v1330 = vld [vmem:[%s1090 + $0x7] sm:$0x1]
    %v1331 = vld [vmem:[%s1090 + $0x17] sm:$0x1]
    %v1332 = vld [vmem:[%s1090 + $0x27] sm:$0x1]
    %v1333 = vld [vmem:[%s1090 + $0x37] sm:$0x1]
    %v1334 = vld [vmem:[%s1090 + $0x47] sm:$0x1]
    %v1335 = vld [vmem:[%s1090 + $0x57] sm:$0x1]
    %v1336 = vld [vmem:[%s1090 + $0x67] sm:$0x1]
    %v1337 = vld [vmem:[%s1090 + $0x77] sm:$0x1]
    %v1346 = vrot.slane %v1331, 7
    %v1347 = vsel %vm140, %v1346, %v1330
    %v1348 = vrot.slane %v1332, 6
    %v1349 = vsel %vm143, %v1348, %v1347
    %v1350 = vrot.slane %v1333, 5
    %v1351 = vsel %vm146, %v1350, %v1349
    %v1352 = vrot.slane %v1334, 4
    %v1353 = vsel %vm149, %v1352, %v1351
    %v1354 = vrot.slane %v1335, 3
    %v1355 = vsel %vm152, %v1354, %v1353
    %v1356 = vrot.slane %v1336, 2
    %v1357 = vsel %vm155, %v1356, %v1355
    %v1358 = vrot.slane %v1337, 1
    %v1359 = vsel %vm158, %v1358, %v1357
    %1360 = vrot.lane.b32.xlu0 %v1359, 17
    %v1361 = vpop.permute.xlu0 %1360
    %1363 = vst.msk [vmem:[#allocation2 + $0x8] sm:$0xff] %vm410, %v1361
    %v1364 = vld [vmem:[%s1090 + $0x8] sm:$0x1]
    %v1365 = vld [vmem:[%s1090 + $0x18] sm:$0x1]
    %v1366 = vld [vmem:[%s1090 + $0x28] sm:$0x1]
    %v1367 = vld [vmem:[%s1090 + $0x38] sm:$0x1]
    %v1368 = vld [vmem:[%s1090 + $0x48] sm:$0x1]
    %v1369 = vld [vmem:[%s1090 + $0x58] sm:$0x1]
    %v1370 = vld [vmem:[%s1090 + $0x68] sm:$0x1]
    %v1371 = vld [vmem:[%s1090 + $0x78] sm:$0x1]
    %v1380 = vrot.slane %v1365, 7
    %v1381 = vsel %vm140, %v1380, %v1364
    %v1382 = vrot.slane %v1366, 6
    %v1383 = vsel %vm143, %v1382, %v1381
    %v1384 = vrot.slane %v1367, 5
    %v1385 = vsel %vm146, %v1384, %v1383
    %v1386 = vrot.slane %v1368, 4
    %v1387 = vsel %vm149, %v1386, %v1385
    %v1388 = vrot.slane %v1369, 3
    %v1389 = vsel %vm152, %v1388, %v1387
    %v1390 = vrot.slane %v1370, 2
    %v1391 = vsel %vm155, %v1390, %v1389
    %v1392 = vrot.slane %v1371, 1
    %v1393 = vsel %vm158, %v1392, %v1391
    %1394 = vrot.lane.b32.xlu0 %v1393, 35
    %v1395 = vpop.permute.xlu0 %1394
    %1397 = vst.msk [vmem:[#allocation2 + $0x8] sm:$0xff] %vm445, %v1395
    %v1398 = vld [vmem:[%s1090 + $0x9] sm:$0x1]
    %v1399 = vld [vmem:[%s1090 + $0x19] sm:$0x1]
    %v1400 = vld [vmem:[%s1090 + $0x29] sm:$0x1]
    %v1401 = vld [vmem:[%s1090 + $0x39] sm:$0x1]
    %v1402 = vld [vmem:[%s1090 + $0x49] sm:$0x1]
    %v1403 = vld [vmem:[%s1090 + $0x59] sm:$0x1]
    %v1404 = vld [vmem:[%s1090 + $0x69] sm:$0x1]
    %v1405 = vld [vmem:[%s1090 + $0x79] sm:$0x1]
    %v1414 = vrot.slane %v1399, 7
    %v1415 = vsel %vm140, %v1414, %v1398
    %v1416 = vrot.slane %v1400, 6
    %v1417 = vsel %vm143, %v1416, %v1415
    %v1418 = vrot.slane %v1401, 5
    %v1419 = vsel %vm146, %v1418, %v1417
    %v1420 = vrot.slane %v1402, 4
    %v1421 = vsel %vm149, %v1420, %v1419
    %v1422 = vrot.slane %v1403, 3
    %v1423 = vsel %vm152, %v1422, %v1421
    %v1424 = vrot.slane %v1404, 2
    %v1425 = vsel %vm155, %v1424, %v1423
    %v1426 = vrot.slane %v1405, 1
    %v1427 = vsel %vm158, %v1426, %v1425
    %1428 = vrot.lane.b32.xlu0 %v1427, 53
    %v1429 = vpop.permute.xlu0 %1428
    %1431 = vst.msk [vmem:[#allocation2 + $0x8] sm:$0xff] %vm480, %v1429
    %v1432 = vld [vmem:[%s1090 + $0xa] sm:$0x1]
    %v1433 = vld [vmem:[%s1090 + $0x1a] sm:$0x1]
    %v1434 = vld [vmem:[%s1090 + $0x2a] sm:$0x1]
    %v1435 = vld [vmem:[%s1090 + $0x3a] sm:$0x1]
    %v1436 = vld [vmem:[%s1090 + $0x4a] sm:$0x1]
    %v1437 = vld [vmem:[%s1090 + $0x5a] sm:$0x1]
    %v1438 = vld [vmem:[%s1090 + $0x6a] sm:$0x1]
    %v1439 = vld [vmem:[%s1090 + $0x7a] sm:$0x1]
    %v1448 = vrot.slane %v1433, 7
    %v1449 = vsel %vm140, %v1448, %v1432
    %v1450 = vrot.slane %v1434, 6
    %v1451 = vsel %vm143, %v1450, %v1449
    %v1452 = vrot.slane %v1435, 5
    %v1453 = vsel %vm146, %v1452, %v1451
    %v1454 = vrot.slane %v1436, 4
    %v1455 = vsel %vm149, %v1454, %v1453
    %v1456 = vrot.slane %v1437, 3
    %v1457 = vsel %vm152, %v1456, %v1455
    %v1458 = vrot.slane %v1438, 2
    %v1459 = vsel %vm155, %v1458, %v1457
    %v1460 = vrot.slane %v1439, 1
    %v1461 = vsel %vm158, %v1460, %v1459
    %1462 = vrot.lane.b32.xlu0 %v1461, 71
    %v1463 = vpop.permute.xlu0 %1462
    %1465 = vst.msk [vmem:[#allocation2 + $0x8] sm:$0xff] %vm515, %v1463
    %v1466 = vld [vmem:[%s1090 + $0xb] sm:$0x1]
    %v1467 = vld [vmem:[%s1090 + $0x1b] sm:$0x1]
    %v1468 = vld [vmem:[%s1090 + $0x2b] sm:$0x1]
    %v1469 = vld [vmem:[%s1090 + $0x3b] sm:$0x1]
    %v1470 = vld [vmem:[%s1090 + $0x4b] sm:$0x1]
    %v1471 = vld [vmem:[%s1090 + $0x5b] sm:$0x1]
    %v1472 = vld [vmem:[%s1090 + $0x6b] sm:$0x1]
    %v1473 = vld [vmem:[%s1090 + $0x7b] sm:$0x1]
    %v1482 = vrot.slane %v1467, 7
    %v1483 = vsel %vm140, %v1482, %v1466
    %v1484 = vrot.slane %v1468, 6
    %v1485 = vsel %vm143, %v1484, %v1483
    %v1486 = vrot.slane %v1469, 5
    %v1487 = vsel %vm146, %v1486, %v1485
    %v1488 = vrot.slane %v1470, 4
    %v1489 = vsel %vm149, %v1488, %v1487
    %v1490 = vrot.slane %v1471, 3
    %v1491 = vsel %vm152, %v1490, %v1489
    %v1492 = vrot.slane %v1472, 2
    %v1493 = vsel %vm155, %v1492, %v1491
    %v1494 = vrot.slane %v1473, 1
    %v1495 = vsel %vm158, %v1494, %v1493
    %1496 = vrot.lane.b32.xlu0 %v1495, 89
    %v1497 = vpop.permute.xlu0 %1496
    %1499 = vst.msk [vmem:[#allocation2 + $0x8] sm:$0xff] %vm550, %v1497
    %v1500 = vld [vmem:[%s1090 + $0xc] sm:$0x1]
    %v1501 = vld [vmem:[%s1090 + $0x1c] sm:$0x1]
    %v1502 = vld [vmem:[%s1090 + $0x2c] sm:$0x1]
    %v1503 = vld [vmem:[%s1090 + $0x3c] sm:$0x1]
    %v1504 = vld [vmem:[%s1090 + $0x4c] sm:$0x1]
    %v1505 = vld [vmem:[%s1090 + $0x5c] sm:$0x1]
    %v1506 = vld [vmem:[%s1090 + $0x6c] sm:$0x1]
    %v1507 = vld [vmem:[%s1090 + $0x7c] sm:$0x1]
    %v1516 = vrot.slane %v1501, 7
    %v1517 = vsel %vm140, %v1516, %v1500
    %v1518 = vrot.slane %v1502, 6
    %v1519 = vsel %vm143, %v1518, %v1517
    %v1520 = vrot.slane %v1503, 5
    %v1521 = vsel %vm146, %v1520, %v1519
    %v1522 = vrot.slane %v1504, 4
    %v1523 = vsel %vm149, %v1522, %v1521
    %v1524 = vrot.slane %v1505, 3
    %v1525 = vsel %vm152, %v1524, %v1523
    %v1526 = vrot.slane %v1506, 2
    %v1527 = vsel %vm155, %v1526, %v1525
    %v1528 = vrot.slane %v1507, 1
    %v1529 = vsel %vm158, %v1528, %v1527
    %1530 = vrot.lane.b32.xlu0 %v1529, 107
    %v1531 = vpop.permute.xlu0 %1530
    %1533 = vst.msk [vmem:[#allocation2 + $0x8] sm:$0xff] %vm585, %v1531
    %v1534 = vld [vmem:[%s1090 + $0xd] sm:$0x1]
    %v1535 = vld [vmem:[%s1090 + $0x1d] sm:$0x1]
    %v1536 = vld [vmem:[%s1090 + $0x2d] sm:$0x1]
    %v1537 = vld [vmem:[%s1090 + $0x3d] sm:$0x1]
    %v1538 = vld [vmem:[%s1090 + $0x4d] sm:$0x1]
    %v1539 = vld [vmem:[%s1090 + $0x5d] sm:$0x1]
    %v1540 = vld [vmem:[%s1090 + $0x6d] sm:$0x1]
    %v1541 = vld [vmem:[%s1090 + $0x7d] sm:$0x1]
    %v1550 = vrot.slane %v1535, 7
    %v1551 = vsel %vm140, %v1550, %v1534
    %v1552 = vrot.slane %v1536, 6
    %v1553 = vsel %vm143, %v1552, %v1551
    %v1554 = vrot.slane %v1537, 5
    %v1555 = vsel %vm146, %v1554, %v1553
    %v1556 = vrot.slane %v1538, 4
    %v1557 = vsel %vm149, %v1556, %v1555
    %v1558 = vrot.slane %v1539, 3
    %v1559 = vsel %vm152, %v1558, %v1557
    %v1560 = vrot.slane %v1540, 2
    %v1561 = vsel %vm155, %v1560, %v1559
    %v1562 = vrot.slane %v1541, 1
    %v1563 = vsel %vm158, %v1562, %v1561
    %1564 = vrot.lane.b32.xlu0 %v1563, 125
    %v1565 = vpop.permute.xlu0 %1564
    %1567 = vst.msk [vmem:[#allocation2 + $0x8] sm:$0xff] %vm620, %v1565
    %1568 = vst.msk [vmem:[#allocation2 + $0x10] sm:$0xff] %vm622, %v1565
    %v1569 = vld [vmem:[%s1090 + $0xe] sm:$0x1]
    %v1570 = vld [vmem:[%s1090 + $0x1e] sm:$0x1]
    %v1571 = vld [vmem:[%s1090 + $0x2e] sm:$0x1]
    %v1572 = vld [vmem:[%s1090 + $0x3e] sm:$0x1]
    %v1573 = vld [vmem:[%s1090 + $0x4e] sm:$0x1]
    %v1574 = vld [vmem:[%s1090 + $0x5e] sm:$0x1]
    %v1575 = vld [vmem:[%s1090 + $0x6e] sm:$0x1]
    %v1576 = vld [vmem:[%s1090 + $0x7e] sm:$0x1]
    %v1585 = vrot.slane %v1570, 7
    %v1586 = vsel %vm140, %v1585, %v1569
    %v1587 = vrot.slane %v1571, 6
    %v1588 = vsel %vm143, %v1587, %v1586
    %v1589 = vrot.slane %v1572, 5
    %v1590 = vsel %vm146, %v1589, %v1588
    %v1591 = vrot.slane %v1573, 4
    %v1592 = vsel %vm149, %v1591, %v1590
    %v1593 = vrot.slane %v1574, 3
    %v1594 = vsel %vm152, %v1593, %v1592
    %v1595 = vrot.slane %v1575, 2
    %v1596 = vsel %vm155, %v1595, %v1594
    %v1597 = vrot.slane %v1576, 1
    %v1598 = vsel %vm158, %v1597, %v1596
    %1599 = vrot.lane.b32.xlu0 %v1598, 15
    %v1600 = vpop.permute.xlu0 %1599
    %1602 = vst.msk [vmem:[#allocation2 + $0x10] sm:$0xff] %vm657, %v1600
    %v1603 = vld [vmem:[%s1090 + $0xf] sm:$0x1]
    %v1604 = vld [vmem:[%s1090 + $0x1f] sm:$0x1]
    %v1605 = vld [vmem:[%s1090 + $0x2f] sm:$0x1]
    %v1606 = vld [vmem:[%s1090 + $0x3f] sm:$0x1]
    %v1607 = vld [vmem:[%s1090 + $0x4f] sm:$0x1]
    %v1608 = vld [vmem:[%s1090 + $0x5f] sm:$0x1]
    %v1609 = vld [vmem:[%s1090 + $0x6f] sm:$0x1]
    %v1610 = vld [vmem:[%s1090 + $0x7f] sm:$0x1]
    %v1619 = vrot.slane %v1604, 7
    %v1620 = vsel %vm140, %v1619, %v1603
    %v1621 = vrot.slane %v1605, 6
    %v1622 = vsel %vm143, %v1621, %v1620
    %v1623 = vrot.slane %v1606, 5
    %v1624 = vsel %vm146, %v1623, %v1622
    %v1625 = vrot.slane %v1607, 4
    %v1626 = vsel %vm149, %v1625, %v1624
    %v1627 = vrot.slane %v1608, 3
    %v1628 = vsel %vm152, %v1627, %v1626
    %v1629 = vrot.slane %v1609, 2
    %v1630 = vsel %vm155, %v1629, %v1628
    %v1631 = vrot.slane %v1610, 1
    %v1632 = vsel %vm158, %v1631, %v1630
    %1633 = vrot.lane.b32.xlu0 %v1632, 33
    %v1634 = vpop.permute.xlu0 %1633
    %1636 = vst.msk [vmem:[#allocation2 + $0x10] sm:$0xff] %vm692, %v1634
    %v1637 = vld [vmem:[#allocation2] sm:$0xff]
    %v1638 = vld [vmem:[#allocation2 + $0x8] sm:$0xff]
    %v1639 = vld [vmem:[#allocation2 + $0x10] sm:$0xff]
    %1640 = vst [vmem:[#allocation3] sm:$0xff] %v1637
    %1641 = vst [vmem:[#allocation3 + $0x8] sm:$0xff] %v1638
    %1642 = vst.msk [vmem:[#allocation3 + $0x10] sm:$0xff] %vm699, %v1639
    %v1643 = vld [vmem:[#allocation2] sm:$0xff]
    %v1644 = vld [vmem:[#allocation2 + $0x8] sm:$0xff]
    %v1645 = vld [vmem:[#allocation2 + $0x10] sm:$0xff]
    %1649 = vrot.lane.b32.xlu0 %v1643, 127
    %v1650 = vpop.permute.xlu0 %1649
    %1651 = vrot.lane.b32.xlu0 %v1644, 127
    %v1652 = vpop.permute.xlu0 %1651
    %1653 = vrot.lane.b32.xlu0 %v1645, 127
    %v1654 = vpop.permute.xlu0 %1653
    %v1655 = vsel %vm713, %v1650, %v1652
    %v1656 = vsel %vm713, %v1652, %v1654
    %1660 = vst [vmem:[#allocation3 + $0x18] sm:$0xff] %v1655
    %1661 = vst [vmem:[#allocation3 + $0x20] sm:$0xff] %v1656
    %1662 = vst.msk [vmem:[#allocation3 + $0x28] sm:$0xff] %vm699, %v1654
    %v1663 = vld [vmem:[#allocation2] sm:$0xff]
    %v1664 = vld [vmem:[#allocation2 + $0x8] sm:$0xff]
    %v1665 = vld [vmem:[#allocation2 + $0x10] sm:$0xff]
    %1669 = vrot.lane.b32.xlu0 %v1663, 126
    %v1670 = vpop.permute.xlu0 %1669
    %1671 = vrot.lane.b32.xlu0 %v1664, 126
    %v1672 = vpop.permute.xlu0 %1671
    %1673 = vrot.lane.b32.xlu0 %v1665, 126
    %v1674 = vpop.permute.xlu0 %1673
    %v1675 = vsel %vm734, %v1670, %v1672
    %v1676 = vsel %vm734, %v1672, %v1674
    %1680 = vst [vmem:[#allocation3 + $0x30] sm:$0xff] %v1675
    %1681 = vst [vmem:[#allocation3 + $0x38] sm:$0xff] %v1676
    %1682 = vst.msk [vmem:[#allocation3 + $0x40] sm:$0xff] %vm699, %v1674
    %v1683 = vld [vmem:[#allocation2] sm:$0xff]
    %v1684 = vld [vmem:[#allocation2 + $0x8] sm:$0xff]
    %v1685 = vld [vmem:[#allocation2 + $0x10] sm:$0xff]
    %1689 = vrot.lane.b32.xlu0 %v1683, 110
    %v1690 = vpop.permute.xlu0 %1689
    %1691 = vrot.lane.b32.xlu0 %v1684, 110
    %v1692 = vpop.permute.xlu0 %1691
    %1693 = vrot.lane.b32.xlu0 %v1685, 110
    %v1694 = vpop.permute.xlu0 %1693
    %v1695 = vsel %vm755, %v1690, %v1692
    %v1696 = vsel %vm755, %v1692, %v1694
    %1700 = vst [vmem:[#allocation3 + $0x48] sm:$0xff] %v1695
    %1701 = vst [vmem:[#allocation3 + $0x50] sm:$0xff] %v1696
    %1702 = vst.msk [vmem:[#allocation3 + $0x58] sm:$0xff] %vm699, %v1694
    %v1703 = vld [vmem:[#allocation2] sm:$0xff]
    %v1704 = vld [vmem:[#allocation2 + $0x8] sm:$0xff]
    %v1705 = vld [vmem:[#allocation2 + $0x10] sm:$0xff]
    %1709 = vrot.lane.b32.xlu0 %v1703, 109
    %v1710 = vpop.permute.xlu0 %1709
    %1711 = vrot.lane.b32.xlu0 %v1704, 109
    %v1712 = vpop.permute.xlu0 %1711
    %1713 = vrot.lane.b32.xlu0 %v1705, 109
    %v1714 = vpop.permute.xlu0 %1713
    %v1715 = vsel %vm776, %v1710, %v1712
    %v1716 = vsel %vm776, %v1712, %v1714
    %1720 = vst [vmem:[#allocation3 + $0x60] sm:$0xff] %v1715
    %1721 = vst [vmem:[#allocation3 + $0x68] sm:$0xff] %v1716
    %1722 = vst.msk [vmem:[#allocation3 + $0x70] sm:$0xff] %vm699, %v1714
    %v1723 = vld [vmem:[#allocation2] sm:$0xff]
    %v1724 = vld [vmem:[#allocation2 + $0x8] sm:$0xff]
    %v1725 = vld [vmem:[#allocation2 + $0x10] sm:$0xff]
    %1729 = vrot.lane.b32.xlu0 %v1723, 108
    %v1730 = vpop.permute.xlu0 %1729
    %1731 = vrot.lane.b32.xlu0 %v1724, 108
    %v1732 = vpop.permute.xlu0 %1731
    %1733 = vrot.lane.b32.xlu0 %v1725, 108
    %v1734 = vpop.permute.xlu0 %1733
    %v1735 = vsel %vm797, %v1730, %v1732
    %v1736 = vsel %vm797, %v1732, %v1734
    %1740 = vst [vmem:[#allocation3 + $0x78] sm:$0xff] %v1735
    %1741 = vst [vmem:[#allocation3 + $0x80] sm:$0xff] %v1736
    %1742 = vst.msk [vmem:[#allocation3 + $0x88] sm:$0xff] %vm699, %v1734
    %v1743 = vld [vmem:[#allocation2] sm:$0xff]
    %v1744 = vld [vmem:[#allocation2 + $0x8] sm:$0xff]
    %v1745 = vld [vmem:[#allocation2 + $0x10] sm:$0xff]
    %1749 = vrot.lane.b32.xlu0 %v1743, 92
    %v1750 = vpop.permute.xlu0 %1749
    %1751 = vrot.lane.b32.xlu0 %v1744, 92
    %v1752 = vpop.permute.xlu0 %1751
    %1753 = vrot.lane.b32.xlu0 %v1745, 92
    %v1754 = vpop.permute.xlu0 %1753
    %v1755 = vsel %vm818, %v1750, %v1752
    %v1756 = vsel %vm818, %v1752, %v1754
    %1760 = vst [vmem:[#allocation3 + $0x90] sm:$0xff] %v1755
    %1761 = vst [vmem:[#allocation3 + $0x98] sm:$0xff] %v1756
    %1762 = vst.msk [vmem:[#allocation3 + $0xa0] sm:$0xff] %vm699, %v1754
    %v1763 = vld [vmem:[#allocation2] sm:$0xff]
    %v1764 = vld [vmem:[#allocation2 + $0x8] sm:$0xff]
    %v1765 = vld [vmem:[#allocation2 + $0x10] sm:$0xff]
    %1769 = vrot.lane.b32.xlu0 %v1763, 91
    %v1770 = vpop.permute.xlu0 %1769
    %1771 = vrot.lane.b32.xlu0 %v1764, 91
    %v1772 = vpop.permute.xlu0 %1771
    %1773 = vrot.lane.b32.xlu0 %v1765, 91
    %v1774 = vpop.permute.xlu0 %1773
    %v1775 = vsel %vm839, %v1770, %v1772
    %v1776 = vsel %vm839, %v1772, %v1774
    %1780 = vst [vmem:[#allocation3 + $0xa8] sm:$0xff] %v1775
    %1781 = vst [vmem:[#allocation3 + $0xb0] sm:$0xff] %v1776
    %1782 = vst.msk [vmem:[#allocation3 + $0xb8] sm:$0xff] %vm699, %v1774
    %v1783 = vld [vmem:[#allocation2] sm:$0xff]
    %v1784 = vld [vmem:[#allocation2 + $0x8] sm:$0xff]
    %v1785 = vld [vmem:[#allocation2 + $0x10] sm:$0xff]
    %1789 = vrot.lane.b32.xlu0 %v1783, 90
    %v1790 = vpop.permute.xlu0 %1789
    %1791 = vrot.lane.b32.xlu0 %v1784, 90
    %v1792 = vpop.permute.xlu0 %1791
    %1793 = vrot.lane.b32.xlu0 %v1785, 90
    %v1794 = vpop.permute.xlu0 %1793
    %v1795 = vsel %vm860, %v1790, %v1792
    %v1796 = vsel %vm860, %v1792, %v1794
    %1800 = vst [vmem:[#allocation3 + $0xc0] sm:$0xff] %v1795
    %1801 = vst [vmem:[#allocation3 + $0xc8] sm:$0xff] %v1796
    %1802 = vst.msk [vmem:[#allocation3 + $0xd0] sm:$0xff] %vm699, %v1794
    %v1803 = vld [vmem:[#allocation3] sm:$0xff]
    %v1804 = vld [vmem:[#allocation3 + $0x8] sm:$0xff]
    %v1805 = vld [vmem:[#allocation3 + $0x10] sm:$0xff]
    %v1806 = vld [vmem:[#allocation3 + $0x18] sm:$0xff]
    %v1807 = vld [vmem:[#allocation3 + $0x20] sm:$0xff]
    %v1808 = vld [vmem:[#allocation3 + $0x28] sm:$0xff]
    %v1809 = vld [vmem:[#allocation3 + $0x30] sm:$0xff]
    %v1810 = vld [vmem:[#allocation3 + $0x38] sm:$0xff]
    %v1811 = vld [vmem:[#allocation3 + $0x40] sm:$0xff]
    %v1812 = vld [vmem:[#allocation3 + $0x48] sm:$0xff]
    %v1813 = vld [vmem:[#allocation3 + $0x50] sm:$0xff]
    %v1814 = vld [vmem:[#allocation3 + $0x58] sm:$0xff]
    %v1815 = vld [vmem:[#allocation3 + $0x60] sm:$0xff]
    %v1816 = vld [vmem:[#allocation3 + $0x68] sm:$0xff]
    %v1817 = vld [vmem:[#allocation3 + $0x70] sm:$0xff]
    %v1818 = vld [vmem:[#allocation3 + $0x78] sm:$0xff]
    %v1819 = vld [vmem:[#allocation3 + $0x80] sm:$0xff]
    %v1820 = vld [vmem:[#allocation3 + $0x88] sm:$0xff]
    %v1821 = vld [vmem:[#allocation3 + $0x90] sm:$0xff]
    %v1822 = vld [vmem:[#allocation3 + $0x98] sm:$0xff]
    %v1823 = vld [vmem:[#allocation3 + $0xa0] sm:$0xff]
    %v1824 = vld [vmem:[#allocation3 + $0xa8] sm:$0xff]
    %v1825 = vld [vmem:[#allocation3 + $0xb0] sm:$0xff]
    %v1826 = vld [vmem:[#allocation3 + $0xb8] sm:$0xff]
    %v1827 = vld [vmem:[#allocation3 + $0xc0] sm:$0xff]
    %v1828 = vld [vmem:[#allocation3 + $0xc8] sm:$0xff]
    %v1829 = vld [vmem:[#allocation3 + $0xd0] sm:$0xff]
    %1830 = vmatpush.msra.mxu0 0.0
    %1831 = vmatpush.msra.mxu0 0.0
    %1832 = vmatpush.msra.mxu0 0.0
    %1833 = vmatpush.msra.mxu0 0.0
    %1834 = vmatpush.msra.mxu0 0.0
    %1835 = vmatpush.msra.mxu0 0.0
    %1836 = vmatpush.msra.mxu0 0.0
    %1837 = vmatpush.msra.mxu0 %v1827
    %1838 = vmatpush.msra.mxu0 %v1824
    %1839 = vmatpush.msra.mxu0 %v1821
    %1840 = vmatpush.msra.mxu0 %v1818
    %1841 = vmatpush.msra.mxu0 %v1815
    %1842 = vmatpush.msra.mxu0 %v1812
    %1843 = vmatpush.msra.mxu0 %v1809
    %1844 = vmatpush.msra.mxu0 %v1806
    %1845 = vmatpush.msra.mxu0 %v1803
    %1846 = vmatmul.f32.gmra.mxu0 %v898
    %v1847 = vpop.f32.mrf.mxu0
    %v1848 = vadd.f32 0.0, %v1847
    %1849 = vdwg.mxu0
    %1850 = vmatpush.msra.mxu0 0.0
    %1851 = vmatpush.msra.mxu0 0.0
    %1852 = vmatpush.msra.mxu0 0.0
    %1853 = vmatpush.msra.mxu0 0.0
    %1854 = vmatpush.msra.mxu0 0.0
    %1855 = vmatpush.msra.mxu0 0.0
    %1856 = vmatpush.msra.mxu0 0.0
    %1857 = vmatpush.msra.mxu0 %v1828
    %1858 = vmatpush.msra.mxu0 %v1825
    %1859 = vmatpush.msra.mxu0 %v1822
    %1860 = vmatpush.msra.mxu0 %v1819
    %1861 = vmatpush.msra.mxu0 %v1816
    %1862 = vmatpush.msra.mxu0 %v1813
    %1863 = vmatpush.msra.mxu0 %v1810
    %1864 = vmatpush.msra.mxu0 %v1807
    %1865 = vmatpush.msra.mxu0 %v1804
    %1866 = vmatmul.f32.gmra.mxu0 %v898
    %v1867 = vpop.f32.mrf.mxu0
    %v1868 = vadd.f32 0.0, %v1867
    %1869 = vdwg.mxu0
    %1870 = vmatpush.msra.mxu0 0.0
    %1871 = vmatpush.msra.mxu0 0.0
    %1872 = vmatpush.msra.mxu0 0.0
    %1873 = vmatpush.msra.mxu0 0.0
    %1874 = vmatpush.msra.mxu0 0.0
    %1875 = vmatpush.msra.mxu0 0.0
    %1876 = vmatpush.msra.mxu0 0.0
    %1877 = vmatpush.msra.mxu0 %v1829
    %1878 = vmatpush.msra.mxu0 %v1826
    %1879 = vmatpush.msra.mxu0 %v1823
    %1880 = vmatpush.msra.mxu0 %v1820
    %1881 = vmatpush.msra.mxu0 %v1817
    %1882 = vmatpush.msra.mxu0 %v1814
    %1883 = vmatpush.msra.mxu0 %v1811
    %1884 = vmatpush.msra.mxu0 %v1808
    %1885 = vmatpush.msra.mxu0 %v1805
    %1886 = vmatmul.f32.gmra.mxu0 %v898
    %v1887 = vpop.f32.mrf.mxu0
    %v1888 = vadd.f32 0.0, %v1887
    %1889 = vdwg.mxu0
    %v1891 = vsel %vm699, %v1888, 0
    %1893 = vmatpush.msra.mxu0 %v81
    %1894 = vmatpush.msra.mxu0 %v79
    %1895 = vmatpush.msra.mxu0 %v77
    %1896 = vmatpush.msra.mxu0 %v75
    %1897 = vmatpush.msra.mxu0 %v73
    %1898 = vmatpush.msra.mxu0 %v71
    %1899 = vmatpush.msra.mxu0 %v69
    %1900 = vmatpush.msra.mxu0 %v67
    %1901 = vmatpush.msra.mxu0 %v65
    %1902 = vmatpush.msra.mxu0 %v63
    %1903 = vmatpush.msra.mxu0 %v61
    %1904 = vmatpush.msra.mxu0 %v59
    %1905 = vmatpush.msra.mxu0 %v57
    %1906 = vmatpush.msra.mxu0 %v55
    %1907 = vmatpush.msra.mxu0 %v53
    %1908 = vmatpush.msra.mxu0 %v51
    %1909 = vmatmul.f32.gmra.mxu0 %v1848
    %v1910 = vpop.f32.mrf.mxu0
    %v1911 = vadd.f32 0.0, %v1910
    %1912 = vdwg.mxu0
    %1913 = vmatpush.msra.mxu0 %v113
    %1914 = vmatpush.msra.mxu0 %v111
    %1915 = vmatpush.msra.mxu0 %v109
    %1916 = vmatpush.msra.mxu0 %v107
    %1917 = vmatpush.msra.mxu0 %v105
    %1918 = vmatpush.msra.mxu0 %v103
    %1919 = vmatpush.msra.mxu0 %v101
    %1920 = vmatpush.msra.mxu0 %v99
    %1921 = vmatpush.msra.mxu0 %v97
    %1922 = vmatpush.msra.mxu0 %v95
    %1923 = vmatpush.msra.mxu0 %v93
    %1924 = vmatpush.msra.mxu0 %v91
    %1925 = vmatpush.msra.mxu0 %v89
    %1926 = vmatpush.msra.mxu0 %v87
    %1927 = vmatpush.msra.mxu0 %v85
    %1928 = vmatpush.msra.mxu0 %v83
    %1929 = vmatmul.f32.gmra.mxu0 %v1868
    %v1930 = vpop.f32.mrf.mxu0
    %v1931 = vadd.f32 %v1911, %v1930
    %1932 = vdwg.mxu0
    %1933 = vmatpush.msra.mxu0 0.0
    %1934 = vmatpush.msra.mxu0 0.0
    %1935 = vmatpush.msra.mxu0 0.0
    %1936 = vmatpush.msra.mxu0 0.0
    %1937 = vmatpush.msra.mxu0 0.0
    %1938 = vmatpush.msra.mxu0 0.0
    %1939 = vmatpush.msra.mxu0 0.0
    %1940 = vmatpush.msra.mxu0 0.0
    %1941 = vmatpush.msra.mxu0 0.0
    %1942 = vmatpush.msra.mxu0 0.0
    %1943 = vmatpush.msra.mxu0 0.0
    %1944 = vmatpush.msra.mxu0 0.0
    %1945 = vmatpush.msra.mxu0 %v121
    %1946 = vmatpush.msra.mxu0 %v119
    %1947 = vmatpush.msra.mxu0 %v117
    %1948 = vmatpush.msra.mxu0 %v115
    %1949 = vmatmul.f32.gmra.mxu0 %v1891
    %v1950 = vpop.f32.mrf.mxu0
    %v1951 = vadd.f32 %v1931, %v1950
    %1952 = vdwg.mxu0
    %1953 = vmatpush.msra.mxu0 %v82
    %1954 = vmatpush.msra.mxu0 %v80
    %1955 = vmatpush.msra.mxu0 %v78
    %1956 = vmatpush.msra.mxu0 %v76
    %1957 = vmatpush.msra.mxu0 %v74
    %1958 = vmatpush.msra.mxu0 %v72
    %1959 = vmatpush.msra.mxu0 %v70
    %1960 = vmatpush.msra.mxu0 %v68
    %1961 = vmatpush.msra.mxu0 %v66
    %1962 = vmatpush.msra.mxu0 %v64
    %1963 = vmatpush.msra.mxu0 %v62
    %1964 = vmatpush.msra.mxu0 %v60
    %1965 = vmatpush.msra.mxu0 %v58
    %1966 = vmatpush.msra.mxu0 %v56
    %1967 = vmatpush.msra.mxu0 %v54
    %1968 = vmatpush.msra.mxu0 %v52
    %1969 = vmatmul.f32.gmra.mxu0 %v1848
    %v1970 = vpop.f32.mrf.mxu0
    %v1971 = vadd.f32 0.0, %v1970
    %1972 = vdwg.mxu0
    %1973 = vmatpush.msra.mxu0 %v114
    %1974 = vmatpush.msra.mxu0 %v112
    %1975 = vmatpush.msra.mxu0 %v110
    %1976 = vmatpush.msra.mxu0 %v108
    %1977 = vmatpush.msra.mxu0 %v106
    %1978 = vmatpush.msra.mxu0 %v104
    %1979 = vmatpush.msra.mxu0 %v102
    %1980 = vmatpush.msra.mxu0 %v100
    %1981 = vmatpush.msra.mxu0 %v98
    %1982 = vmatpush.msra.mxu0 %v96
    %1983 = vmatpush.msra.mxu0 %v94
    %1984 = vmatpush.msra.mxu0 %v92
    %1985 = vmatpush.msra.mxu0 %v90
    %1986 = vmatpush.msra.mxu0 %v88
    %1987 = vmatpush.msra.mxu0 %v86
    %1988 = vmatpush.msra.mxu0 %v84
    %1989 = vmatmul.f32.gmra.mxu0 %v1868
    %v1990 = vpop.f32.mrf.mxu0
    %v1991 = vadd.f32 %v1971, %v1990
    %1992 = vdwg.mxu0
    %1993 = vmatpush.msra.mxu0 0.0
    %1994 = vmatpush.msra.mxu0 0.0
    %1995 = vmatpush.msra.mxu0 0.0
    %1996 = vmatpush.msra.mxu0 0.0
    %1997 = vmatpush.msra.mxu0 0.0
    %1998 = vmatpush.msra.mxu0 0.0
    %1999 = vmatpush.msra.mxu0 0.0
    %2000 = vmatpush.msra.mxu0 0.0
    %2001 = vmatpush.msra.mxu0 0.0
    %2002 = vmatpush.msra.mxu0 0.0
    %2003 = vmatpush.msra.mxu0 0.0
    %2004 = vmatpush.msra.mxu0 0.0
    %2005 = vmatpush.msra.mxu0 %v122
    %2006 = vmatpush.msra.mxu0 %v120
    %2007 = vmatpush.msra.mxu0 %v118
    %2008 = vmatpush.msra.mxu0 %v116
    %2009 = vmatmul.f32.gmra.mxu0 %v1891
    %v2010 = vpop.f32.mrf.mxu0
    %v2011 = vadd.f32 %v1991, %v2010
    %2012 = vdwg.mxu0
    %v2015 = vrot.slane %v2011, 4
    %v2016 = vsel %vm1086, %v1951, %v2015
    %s2018 = scalar_lea.vmem %s3, 8
    %2019 = vst [vmem:[%s2018] sm:$0xff] %v2016
    // Predicated region
    $region22: #{downsample_forward.1} parent=1 // pred_check
      _
    $region23: #{downsample_forward.1} parent=1 // pred_check_branch
      %2021 = sbr.rel (0) target = $region25
    $region24: #{downsample_forward.1} parent=1 // pred_region
      _
    $region25: #{downsample_forward.1} parent=1 // pred_fallthru
      _
    // Predicated region
    $region26: #{downsample_forward.1} parent=1 // pred_check
      _
    $region27: #{downsample_forward.1} parent=1 // pred_check_branch
      %2023 = sbr.rel (0) target = $region29
    $region28: #{downsample_forward.1} parent=1 // pred_region
      _
    $region29: #{downsample_forward.1} parent=1 // pred_fallthru
      _
    %2024 = vsyncpa [#allocation5], 1
    %2025 = vsyncpa [#allocation7], 1

</llo_original>
